<compile_context>
chip_gen: v6e
topology: v6e:2x2x1
jax: 0.10.0
libtpu: 0.0.40
codegen_flags: <defaults>
</compile_context>

<pallas_src>
import jax
import jax.numpy as jnp
from jax.experimental import pallas as pl
from jax.experimental.pallas import tpu as pltpu

TAU = 2.0
THRESHOLD = 1.0
BN_EPS = 1e-5


# ----------------------------------------------------------------------------
# Pallas kernel: one (timestep, spatial-tile) block of the MLP.
#   LIF -> conv1x1(+BN1, scale folded) -> LIF -> conv1x1(+BN2) -> +identity
# Membranes persist in VMEM scratch across the trailing (arbitrary) T axis.
# ----------------------------------------------------------------------------
def _sdt_mlp_kernel(x_ref, w1_ref, b1_ref, w2_ref, b2_ref, o_ref, mem1, mem2):
    # Fresh spatial tile (t == 0) -> reset both LIF membranes.
    @pl.when(pl.program_id(1) == 0)
    def _():
        mem1[...] = jnp.zeros_like(mem1)
        mem2[...] = jnp.zeros_like(mem2)

    x = x_ref[...]                                      # (tile_n, C) f32

    # --- LIF 1: mem += (x - mem)/tau ; spike = heaviside(mem - thr); hard reset
    m1_prev = mem1[...]
    if TAU == 2.0:
        m1 = (x + m1_prev) * jnp.float32(0.5)           # tau=2 specialization
    else:
        m1 = m1_prev + (x - m1_prev) * jnp.float32(1.0 / TAU)
    s1 = m1 >= THRESHOLD
    mem1[...] = jnp.where(s1, 0.0, m1)

    # --- conv1x1 + BN1 (scale folded into w1, shift in b1); bf16 MXU, f32 acc
    h = jnp.dot(s1.astype(jnp.bfloat16), w1_ref[...],
                preferred_element_type=jnp.float32) + b1_ref[...]

    # --- LIF 2
    m2_prev = mem2[...]
    if TAU == 2.0:
        m2 = (h + m2_prev) * jnp.float32(0.5)
    else:
        m2 = m2_prev + (h - m2_prev) * jnp.float32(1.0 / TAU)
    s2 = m2 >= THRESHOLD
    mem2[...] = jnp.where(s2, 0.0, m2)

    # --- conv1x1 + BN2 + residual
    y = jnp.dot(s2.astype(jnp.bfloat16), w2_ref[...],
                preferred_element_type=jnp.float32) + b2_ref[...]
    o_ref[...] = (y + x).astype(o_ref.dtype)


# ----------------------------------------------------------------------------
# Tile selection (generation-aware VMEM budget, MXU-aligned tiles)
# ----------------------------------------------------------------------------
def _vmem_capacity_bytes():
    try:
        cap = int(pltpu.get_tpu_info().vmem_capacity_bytes)
        if cap > 0:
            return cap
    except Exception:
        pass
    return 64 << 20  # conservative fallback (v7x per-core VMEM)


def _choose_tile_n(N, C, Hd, budget_bytes, max_tile_n=2048):
    """Largest multiple of 128 that fits the VMEM budget; capped so the parallel
    (N) grid axis keeps >= ~4 steps when N is large enough (v7x megacore),
    without dropping below 256 rows (v6e/v7x MXU fill)."""
    def est(tn):
        io = 2 * 2 * tn * C * 4                       # x + out blocks, double-buffered
        mem = tn * (C + Hd) * 4                       # LIF membrane scratch
        tmp = 2 * tn * (C + Hd) * 4                   # live f32 temporaries (m/h/s/y)
        w = 2 * (2 * C * Hd * 2 + (C + Hd) * 4)       # bf16 weights + f32 biases, dbl-buf
        return io + mem + tmp + w

    tn = 128
    while tn + 128 <= max_tile_n and est(tn + 128) <= budget_bytes:
        tn += 128

    n_pad = ((max(N, 128) + 127) // 128) * 128
    tn = min(tn, n_pad)                               # never tile past the padded problem
    if n_pad >= 4 * 256:
        tn = min(tn, max(256, (n_pad // 4) // 128 * 128))
    return tn


def sdt_mlp_pallas(x_tnc, w1q, b1, w2q, b2):
    """x_tnc: [T, N, C] f32.  w1q/w2q: bf16 (BN scale folded).  Returns [T, N, C] f32."""
    T, N, C = x_tnc.shape
    Hd = w1q.shape[1]

    vmem_cap = _vmem_capacity_bytes()
    # Scoped-VMEM limit: leave headroom under physical capacity; ~96 MiB on
    # v5e/v6e (128 MiB physical), ~56 MiB on v7x (64 MiB physical).
    vmem_limit = max(min(vmem_cap - (8 << 20), 96 << 20), 32 << 20)
    budget = vmem_limit - (8 << 20)                   # Mosaic-internal-scratch headroom

    tile_n = _choose_tile_n(N, C, Hd, budget)
    N_pad = ((N + tile_n - 1) // tile_n) * tile_n
    if N_pad != N:
        x_tnc = jnp.pad(x_tnc, ((0, 0), (0, N_pad - N), (0, 0)))

    grid = (N_pad // tile_n, T)
    out = pl.pallas_call(
        _sdt_mlp_kernel,
        out_shape=jax.ShapeDtypeStruct((T, N_pad, C), jnp.float32),
        grid_spec=pltpu.PrefetchScalarGridSpec(
            num_scalar_prefetch=0,
            grid=grid,
            in_specs=[
                pl.BlockSpec((None, tile_n, C), lambda n, t: (t, n, 0)),   # x[t] tile
                pl.BlockSpec((C, Hd), lambda n, t: (0, 0)),                # w1 (bf16)
                pl.BlockSpec((1, Hd), lambda n, t: (0, 0)),                # b1
                pl.BlockSpec((Hd, C), lambda n, t: (0, 0)),                # w2 (bf16)
                pl.BlockSpec((1, C), lambda n, t: (0, 0)),                 # b2
            ],
            out_specs=pl.BlockSpec((None, tile_n, C), lambda n, t: (t, n, 0)),
            scratch_shapes=[
                pltpu.VMEM((tile_n, C), jnp.float32),     # LIF1 membrane
                pltpu.VMEM((tile_n, Hd), jnp.float32),    # LIF2 membrane
            ],
        ),
        compiler_params=pltpu.CompilerParams(
            dimension_semantics=("parallel", "arbitrary"),
            vmem_limit_bytes=int(vmem_limit),
        ),
    )(x_tnc, w1q, b1, w2q, b2)

    return out[:, :N, :] if N_pad != N else out


# ----------------------------------------------------------------------------
# Host-side helpers: BN(eval) folding and layout conversion
# ----------------------------------------------------------------------------
def fold_conv_bn(w, cb, g, be, mu, var, eps=BN_EPS):
    """Fold conv bias + eval-mode BN into (bf16 weight, f32 bias row)."""
    a = g / jnp.sqrt(var + eps)                       # per-channel scale
    w_f = (w * a[None, :]).astype(jnp.bfloat16)       # scale folded into weight
    b_f = ((cb - mu) * a + be).astype(jnp.float32)
    return w_f, b_f.reshape(1, -1)


def nchw_to_tnc(x, step):
    TB, C, H, W = x.shape
    B = TB // step
    return (x.reshape(step, B, C, H, W)
             .transpose(0, 1, 3, 4, 2)
             .reshape(step, B * H * W, C))


def tnc_to_nchw(x_tnc, step, B, C, H, W):
    return (x_tnc.reshape(step, B, H, W, C)
                 .transpose(0, 1, 4, 2, 3)
                 .reshape(step * B, C, H, W))


def sdt_block_s_forward(x_nchw, params, *, step):
    # TODO(synk): SDSA attention (attn_layer looked up via globals() in the
    # reference; definition not provided) -> identity passthrough.
    x = x_nchw
    TB, C, H, W = x.shape
    B = TB // step
    # NOTE: in a full network this NCHW <-> channels-last conversion should be
    # hoisted to the network boundary (done once, not per block); it is kept
    # here only because the module's external interface is NCHW.
    x_tnc = nchw_to_tnc(x, step)
    out_tnc = sdt_mlp_pallas(x_tnc, *params)
    return tnc_to_nchw(out_tnc, step, B, C, H, W)


# ----------------------------------------------------------------------------
# Pure-JAX reference (explicit conv bias + BN, explicit time loop)
# ----------------------------------------------------------------------------
def mlp_reference(x_tnc, raw):
    w1, cb1, g1, be1, mu1, var1, w2, cb2, g2, be2, mu2, var2 = raw
    a1 = g1 / jnp.sqrt(var1 + BN_EPS)
    a2 = g2 / jnp.sqrt(var2 + BN_EPS)
    T = x_tnc.shape[0]
    mem1 = jnp.zeros_like(x_tnc[0])
    mem2 = jnp.zeros((x_tnc.shape[1], w1.shape[1]), jnp.float32)
    outs = []
    for t in range(T):
        xt = x_tnc[t]
        mem1 = mem1 + (xt - mem1) / TAU
        s1 = (mem1 >= THRESHOLD).astype(jnp.float32)
        mem1 = mem1 * (1.0 - s1)
        h = s1 @ w1 + cb1
        h = (h - mu1) * a1 + be1
        mem2 = mem2 + (h - mem2) / TAU
        s2 = (mem2 >= THRESHOLD).astype(jnp.float32)
        mem2 = mem2 * (1.0 - s2)
        y = s2 @ w2 + cb2
        y = (y - mu2) * a2 + be2
        outs.append(y + xt)
    return jnp.stack(outs)


if __name__ == "__main__":
    # Small shapes consistent with the module (embed_dim=C, mlp_ratio=4).
    # C is a multiple of 128 so loads/stores are lane-dense (default
    # embed_dim=384 is also a multiple of 128).
    step, B, C, H, W = 4, 2, 128, 8, 8
    mlp_ratio = 4.0
    Hd = int(C * mlp_ratio)                      # 512
    TB = step * B

    key = jax.random.PRNGKey(0)
    ks = jax.random.split(key, 14)

    # Test data is built from small dyadic values so every intermediate
    # (spikes, membranes, matmul sums) is exact in f32 AND in the bf16-weight
    # path -> the kernel matches the f32 reference bit-for-bit regardless of
    # accumulation order; no spurious spike flips.
    def dy(k, shape, scale, lo, hi):
        return jax.random.randint(k, shape, lo, hi).astype(jnp.float32) * scale

    x = dy(ks[0], (TB, C, H, W), 0.25, -16, 17)              # |x| <= 4, mult of 1/4

    pow2 = jnp.array([0.5, 1.0, 2.0], jnp.float32)

    w1 = dy(ks[1], (C, Hd), 1.0 / 64, -32, 33)               # bf16-exact
    cb1 = dy(ks[2], (Hd,), 1.0 / 32, -8, 9)
    mu1 = dy(ks[3], (Hd,), 1.0 / 32, -8, 9)
    be1 = dy(ks[4], (Hd,), 1.0 / 32, -8, 9)
    var1 = jax.random.uniform(ks[5], (Hd,), jnp.float32, 0.25, 4.0)
    c1 = pow2[jax.random.randint(ks[6], (Hd,), 0, 3)]
    g1 = c1 * jnp.sqrt(var1 + BN_EPS)                        # folded BN scale == c1 exactly

    w2 = dy(ks[7], (Hd, C), 1.0 / 64, -32, 33)
    cb2 = dy(ks[8], (C,), 1.0 / 32, -8, 9)
    mu2 = dy(ks[9], (C,), 1.0 / 32, -8, 9)
    be2 = dy(ks[10], (C,), 1.0 / 32, -8, 9)
    var2 = jax.random.uniform(ks[11], (C,), jnp.float32, 0.25, 4.0)
    c2 = pow2[jax.random.randint(ks[12], (C,), 0, 3)]
    g2 = c2 * jnp.sqrt(var2 + BN_EPS)

    # Fold conv bias + BN (eval mode); cast scale-folded weights to bf16.
    w1q, b1 = fold_conv_bn(w1, cb1, g1, be1, mu1, var1)
    w2q, b2 = fold_conv_bn(w2, cb2, g2, be2, mu2, var2)
    params = (w1q, b1, w2q, b2)
    raw = (w1, cb1, g1, be1, mu1, var1, w2, cb2, g2, be2, mu2, var2)

    # --- main check (N = 128, no padding) ---
    out = sdt_block_s_forward(x, params, step=step)
    out = jax.block_until_ready(out)
    assert out.shape == (TB, C, H, W)

    x_tnc = nchw_to_tnc(x, step)
    ref = tnc_to_nchw(mlp_reference(x_tnc, raw), step, B, C, H, W)
    err = float(jnp.max(jnp.abs(out - ref)))
    assert err < 1e-4, f"mismatch vs reference: {err}"

    # --- padding-path check (B=3 -> N = 192, padded to a full 256-row tile) ---
    B2 = 3
    x2 = dy(ks[13], (step * B2, C, H, W), 0.25, -16, 17)
    out2 = sdt_block_s_forward(x2, params, step=step)
    out2 = jax.block_until_ready(out2)
    assert out2.shape == (step * B2, C, H, W)

    x2_tnc = nchw_to_tnc(x2, step)
    ref2 = tnc_to_nchw(mlp_reference(x2_tnc, raw), step, B2, C, H, W)
    err2 = float(jnp.max(jnp.abs(out2 - ref2)))
    assert err2 < 1e-4, f"mismatch vs reference (padded N): {err2}"

    print("KERNEL_OK")
</pallas_src>

<mosaic_0001>
module attributes {stable_mosaic.version = 11 : i64} {
  func.func @_sdt_mlp_kernel(%arg0: i32, %arg1: i32, %arg2: memref<1x128x128xf32, #tpu.memory_space<vmem>>, %arg3: memref<128x512xbf16, #tpu.memory_space<vmem>>, %arg4: memref<1x512xf32, #tpu.memory_space<vmem>>, %arg5: memref<512x128xbf16, #tpu.memory_space<vmem>>, %arg6: memref<1x128xf32, #tpu.memory_space<vmem>>, %arg7: memref<1x128x128xf32, #tpu.memory_space<vmem>>, %arg8: memref<128x128xf32, #tpu.memory_space<vmem>>, %arg9: memref<128x512xf32, #tpu.memory_space<vmem>>) attributes {dimension_semantics = [#tpu.dimension_semantics<parallel>, #tpu.dimension_semantics<arbitrary>], iteration_bounds = array<i64: 1, 4>, scalar_prefetch = 0 : i64, scratch_operands = 2 : i64, tpu.core_type = #tpu.core_type<tc>, window_params = [{transform_indices = @transform_0, window_bounds = array<i64: 1, 128, 128>}, {pipeline_mode = #tpu.pipeline_mode<synchronous>, transform_indices = @transform_1, window_bounds = array<i64: 128, 512>}, {pipeline_mode = #tpu.pipeline_mode<synchronous>, transform_indices = @transform_2, window_bounds = array<i64: 1, 512>}, {pipeline_mode = #tpu.pipeline_mode<synchronous>, transform_indices = @transform_3, window_bounds = array<i64: 512, 128>}, {pipeline_mode = #tpu.pipeline_mode<synchronous>, transform_indices = @transform_4, window_bounds = array<i64: 1, 128>}, {transform_indices = @transform_5, window_bounds = array<i64: 1, 128, 128>}]} {
    %c0_i32 = arith.constant 0 : i32
    %0 = arith.cmpi eq, %arg1, %c0_i32 : i32
    %1 = arith.extui %0 : i1 to i32
    %c0_i32_0 = arith.constant 0 : i32
    %2 = arith.cmpi ne, %1, %c0_i32_0 : i32
    scf.if %2 {
      %cst_29 = arith.constant 0.000000e+00 : f32
      %43 = vector.broadcast %cst_29 : f32 to vector<128x128xf32>
      %c0_30 = arith.constant 0 : index
      %c0_31 = arith.constant 0 : index
      %44 = vector.load %arg8[%c0_30, %c0_31] : memref<128x128xf32, #tpu.memory_space<vmem>>, vector<128x128xf32>
      tpu.vector_store %arg8[%c0_30, %c0_31], %43 {strides = array<i32>} : memref<128x128xf32, #tpu.memory_space<vmem>>, vector<128x128xf32>,
      %cst_32 = arith.constant 0.000000e+00 : f32
      %45 = vector.broadcast %cst_32 : f32 to vector<128x512xf32>
      %c0_33 = arith.constant 0 : index
      %c0_34 = arith.constant 0 : index
      %46 = vector.load %arg9[%c0_33, %c0_34] : memref<128x512xf32, #tpu.memory_space<vmem>>, vector<128x512xf32>
      tpu.vector_store %arg9[%c0_33, %c0_34], %45 {strides = array<i32>} : memref<128x512xf32, #tpu.memory_space<vmem>>, vector<128x512xf32>,
    } else {
    }
    %c0 = arith.constant 0 : index
    %c0_1 = arith.constant 0 : index
    %c0_2 = arith.constant 0 : index
    %3 = vector.load %arg2[%c0, %c0_1, %c0_2] : memref<1x128x128xf32, #tpu.memory_space<vmem>>, vector<1x128x128xf32>
    %4 = vector.shape_cast %3 : vector<1x128x128xf32> to vector<128x128xf32>
    %c0_3 = arith.constant 0 : index
    %c0_4 = arith.constant 0 : index
    %5 = vector.load %arg8[%c0_3, %c0_4] : memref<128x128xf32, #tpu.memory_space<vmem>>, vector<128x128xf32>
    %6 = arith.addf %4, %5 : vector<128x128xf32>
    %cst = arith.constant 5.000000e-01 : f32
    %7 = vector.broadcast %cst : f32 to vector<128x128xf32>
    %8 = arith.mulf %6, %7 : vector<128x128xf32>
    %cst_5 = arith.constant 1.000000e+00 : f32
    %9 = vector.broadcast %cst_5 : f32 to vector<128x128xf32>
    %10 = arith.cmpf oge, %8, %9 : vector<128x128xf32>
    %cst_6 = arith.constant 0.000000e+00 : f32
    %11 = vector.broadcast %cst_6 : f32 to vector<128x128xf32>
    %12 = arith.select %10, %11, %8 : vector<128x128xi1>, vector<128x128xf32>
    %c0_7 = arith.constant 0 : index
    %c0_8 = arith.constant 0 : index
    %13 = vector.load %arg8[%c0_7, %c0_8] : memref<128x128xf32, #tpu.memory_space<vmem>>, vector<128x128xf32>
    tpu.vector_store %arg8[%c0_7, %c0_8], %12 {strides = array<i32>} : memref<128x128xf32, #tpu.memory_space<vmem>>, vector<128x128xf32>,
    %14 = arith.extui %10 : vector<128x128xi1> to vector<128x128xi32>
    %15 = arith.sitofp %14 : vector<128x128xi32> to vector<128x128xf32>
    %16 = arith.truncf %15 : vector<128x128xf32> to vector<128x128xbf16>
    %c0_9 = arith.constant 0 : index
    %c0_10 = arith.constant 0 : index
    %17 = vector.load %arg3[%c0_9, %c0_10] : memref<128x512xbf16, #tpu.memory_space<vmem>>, vector<128x512xbf16>
    %cst_11 = arith.constant dense<0.000000e+00> : vector<128x512xf32>
    %18 = tpu.matmul %16, %17, %cst_11 {dimension_numbers = #tpu.dot_dimension_numbers<[1], [0], [0], [1], [0, 0, 1, 1], [], []>} : vector<128x128xbf16>, vector<128x512xbf16>, vector<128x512xf32> -> vector<128x512xf32>
    %c0_12 = arith.constant 0 : index
    %c0_13 = arith.constant 0 : index
    %19 = vector.load %arg4[%c0_12, %c0_13] : memref<1x512xf32, #tpu.memory_space<vmem>>, vector<1x512xf32>
    %20 = vector.broadcast %19 : vector<1x512xf32> to vector<128x512xf32>
    %21 = arith.addf %18, %20 : vector<128x512xf32>
    %c0_14 = arith.constant 0 : index
    %c0_15 = arith.constant 0 : index
    %22 = vector.load %arg9[%c0_14, %c0_15] : memref<128x512xf32, #tpu.memory_space<vmem>>, vector<128x512xf32>
    %23 = arith.addf %21, %22 : vector<128x512xf32>
    %cst_16 = arith.constant 5.000000e-01 : f32
    %24 = vector.broadcast %cst_16 : f32 to vector<128x512xf32>
    %25 = arith.mulf %23, %24 : vector<128x512xf32>
    %cst_17 = arith.constant 1.000000e+00 : f32
    %26 = vector.broadcast %cst_17 : f32 to vector<128x512xf32>
    %27 = arith.cmpf oge, %25, %26 : vector<128x512xf32>
    %cst_18 = arith.constant 0.000000e+00 : f32
    %28 = vector.broadcast %cst_18 : f32 to vector<128x512xf32>
    %29 = arith.select %27, %28, %25 : vector<128x512xi1>, vector<128x512xf32>
    %c0_19 = arith.constant 0 : index
    %c0_20 = arith.constant 0 : index
    %30 = vector.load %arg9[%c0_19, %c0_20] : memref<128x512xf32, #tpu.memory_space<vmem>>, vector<128x512xf32>
    tpu.vector_store %arg9[%c0_19, %c0_20], %29 {strides = array<i32>} : memref<128x512xf32, #tpu.memory_space<vmem>>, vector<128x512xf32>,
    %31 = arith.extui %27 : vector<128x512xi1> to vector<128x512xi32>
    %32 = arith.sitofp %31 : vector<128x512xi32> to vector<128x512xf32>
    %33 = arith.truncf %32 : vector<128x512xf32> to vector<128x512xbf16>
    %c0_21 = arith.constant 0 : index
    %c0_22 = arith.constant 0 : index
    %34 = vector.load %arg5[%c0_21, %c0_22] : memref<512x128xbf16, #tpu.memory_space<vmem>>, vector<512x128xbf16>
    %cst_23 = arith.constant dense<0.000000e+00> : vector<128x128xf32>
    %35 = tpu.matmul %33, %34, %cst_23 {dimension_numbers = #tpu.dot_dimension_numbers<[1], [0], [0], [1], [0, 0, 1, 1], [], []>} : vector<128x512xbf16>, vector<512x128xbf16>, vector<128x128xf32> -> vector<128x128xf32>
    %c0_24 = arith.constant 0 : index
    %c0_25 = arith.constant 0 : index
    %36 = vector.load %arg6[%c0_24, %c0_25] : memref<1x128xf32, #tpu.memory_space<vmem>>, vector<1x128xf32>
    %37 = vector.broadcast %36 : vector<1x128xf32> to vector<128x128xf32>
    %38 = arith.addf %35, %37 : vector<128x128xf32>
    %39 = arith.addf %38, %4 : vector<128x128xf32>
    %c0_26 = arith.constant 0 : index
    %c0_27 = arith.constant 0 : index
    %c0_28 = arith.constant 0 : index
    %40 = vector.load %arg7[%c0_26, %c0_27, %c0_28] : memref<1x128x128xf32, #tpu.memory_space<vmem>>, vector<1x128x128xf32>
    %41 = vector.shape_cast %40 : vector<1x128x128xf32> to vector<128x128xf32>
    %42 = vector.shape_cast %39 : vector<128x128xf32> to vector<1x128x128xf32>
    tpu.vector_store %arg7[%c0_26, %c0_27, %c0_28], %42 {strides = array<i32>} : memref<1x128x128xf32, #tpu.memory_space<vmem>>, vector<1x128x128xf32>,
    return
  }
  func.func @transform_0(%arg0: i32, %arg1: i32) -> (i32, i32, i32) {
    %c0_i32 = arith.constant 0 : i32
    %c0_i32_0 = arith.constant 0 : i32
    return %arg1, %arg0, %c0_i32 : i32, i32, i32
  }
  func.func @transform_1(%arg0: i32, %arg1: i32) -> (i32, i32) {
    %c0_i32 = arith.constant 0 : i32
    %c0_i32_0 = arith.constant 0 : i32
    %c0_i32_1 = arith.constant 0 : i32
    return %c0_i32, %c0_i32_0 : i32, i32
  }
  func.func @transform_2(%arg0: i32, %arg1: i32) -> (i32, i32) {
    %c0_i32 = arith.constant 0 : i32
    %c0_i32_0 = arith.constant 0 : i32
    %c0_i32_1 = arith.constant 0 : i32
    return %c0_i32, %c0_i32_0 : i32, i32
  }
  func.func @transform_3(%arg0: i32, %arg1: i32) -> (i32, i32) {
    %c0_i32 = arith.constant 0 : i32
    %c0_i32_0 = arith.constant 0 : i32
    %c0_i32_1 = arith.constant 0 : i32
    return %c0_i32, %c0_i32_0 : i32, i32
  }
  func.func @transform_4(%arg0: i32, %arg1: i32) -> (i32, i32) {
    %c0_i32 = arith.constant 0 : i32
    %c0_i32_0 = arith.constant 0 : i32
    %c0_i32_1 = arith.constant 0 : i32
    return %c0_i32, %c0_i32_0 : i32, i32
  }
  func.func @transform_5(%arg0: i32, %arg1: i32) -> (i32, i32, i32) {
    %c0_i32 = arith.constant 0 : i32
    %c0_i32_0 = arith.constant 0 : i32
    return %arg1, %arg0, %c0_i32 : i32, i32, i32
  }
}

</mosaic_0001>

<llo_original>
// kernel: tpu_custom_call.1
$region0: #{tpu_custom_call.1}
  #allocation0 [shape = 'u32[]', space=smem, size = 0x4, offset = 0x4, fixed_abs, tag = 'smem constant byte address 0x4 - core index']
  #allocation1 [shape = 'u32[144,128]{1,0:T(1,128)}', space=vmem, size = 0x12000, scoped, tag = 'internal scratch']
  #allocation2 [shape = 'f32[128,128]{1,0:T(8,128)}', space=vmem, size = 0x10000, scoped, tag = 'scratch operand']
  #allocation3 [shape = 'f32[128,512]{1,0:T(8,128)}', space=vmem, size = 0x40000, scoped, tag = 'scratch operand']
  %s0 = inlined_call_operand.hbm [shape: f32[4,128,128], index: 0, kind: input, shape index: {}]
  %s1 = inlined_call_operand.hbm [shape: bf16[128,512], index: 1, kind: input, shape index: {}]
  %s2 = inlined_call_operand.hbm [shape: f32[1,512], index: 2, kind: input, shape index: {}]
  %s3 = inlined_call_operand.hbm [shape: bf16[512,128], index: 3, kind: input, shape index: {}]
  %s4 = inlined_call_operand.vmem [shape: f32[1,128], index: 4, kind: input, shape index: {}]
  %s5 = inlined_call_operand.hbm [shape: f32[4,128,128], index: 5, kind: output, shape index: {}]
  %s6 = sld [smem:[#allocation0]]
  $region73: #{tpu_custom_call.1} parent=0
    _
  %s8 = ssub.s32 1, %s6
  %s9 = scalar_select 0, %s8, %s6
  $region1: #{tpu_custom_call.1} parent=0
    #allocation4 [shape = 'u8[131072]{0}', space=vmem, size = 0x20000, scoped, tag = 'input window, operand 0']
    #allocation5 [shape = 's32[2]{0}', space=sflag, size = 0x8, scoped, tag = 'scoped memory for tpu_custom_call.1']
    #allocation6 [shape = 's32[2]{0}', space=sflag, size = 0x8, scoped, tag = 'scoped memory for tpu_custom_call.1']
    #allocation7 [shape = 'u8[131072]{0}', space=vmem, size = 0x20000, scoped, tag = 'input window, operand 1, single buffered']
    #allocation8 [shape = 's32[1]{0}', space=sflag, size = 0x4, scoped, tag = 'scoped memory for tpu_custom_call.1']
    #allocation9 [shape = 'u8[2048]{0}', space=vmem, size = 0x800, scoped, tag = 'input window, operand 2, single buffered']
    #allocation10 [shape = 'u8[131072]{0}', space=vmem, size = 0x20000, scoped, tag = 'input window, operand 3, single buffered']
    #allocation11 [shape = 's32[1]{0}', space=sflag, size = 0x4, scoped, tag = 'scoped memory for tpu_custom_call.1']
    #allocation12 [shape = 'u8[131072]{0}', space=vmem, size = 0x20000, scoped, tag = 'output window, operand 0']
    %10 = vsyncpa [#allocation5], 0
    %s11 = scalar_lea.sflag [#allocation5], 1
    %12 = vsyncpa %s11, 0
    %13 = vsyncpa [#allocation8], 0
    %14 = vsyncpa [#allocation11], 0
    %15 = vsyncpa [#allocation6], 0
    %s16 = scalar_lea.sflag [#allocation6], 1
    %17 = vsyncpa %s16, 0
    loop: start=0, step=1, limit=6
    $region2: #{tpu_custom_call.1} parent=1 // loop_pre_header
      _
    $region3: #{tpu_custom_call.1} parent=1 // loop_header
      %s19 = sphi 0, %s23
      %p20 = scmp.ge.s32.totalorder %s19, 6
      %s26 = sphi 0, %s38
      %s27 = sphi 0, %s34
      %s28 = sphi 0, %s26
      %s29 = sphi 0, %s27
      %s30 = sphi 0, %s28
      %s31 = sphi 0, %s29
      %s43 = sphi 0, %s45
      %s46 = sphi 0, %s43
      %s47 = sphi 0, %s46
      %s63 = sphi 0, %s47
      %s67 = sphi 0, %s67
      %s69 = sphi 0, %s67
      %s70 = sphi 0, %s69
      %s84 = sphi 0, %s70
      %s88 = sphi 0, %s88
      %s90 = sphi 0, %s88
      %s91 = sphi 0, %s90
      %s105 = sphi 0, %s91
      %s109 = sphi 0, %s109
      %s111 = sphi 0, %s109
      %s112 = sphi 0, %s111
      %s126 = sphi 0, %s112
      %s130 = sphi 0, %s130
      %s132 = sphi 0, %s130
      %s133 = sphi 0, %s132
      %s147 = sphi 0, %s133
      %s155 = sphi 0, %s157
      %s158 = sphi 0, %s155
      %s159 = sphi 0, %s158
      %s175 = sphi 0, %s159
    $region4: #{tpu_custom_call.1} parent=1 // loop_header_branch
      %22 = sbr.rel (%p20) target = $region8
    $region5: #{tpu_custom_call.1} parent=1 // loop_body
      %s24 = ssub.s32 %s19, 1
      %s25 = ssub.s32 %s19, 2
      %s32 = sadd.s32 1, %s27
      %p33 = scmp.ge.s32.totalorder %s32, 4
      %s34 = scalar_select %p33, 0, %s32
      %s35 = sadd.s32 1, %s26
      %s36 = scalar_select %p33, %s35, %s26
      %p37 = scmp.ge.s32.totalorder %s36, 1
      %s38 = scalar_select %p37, 0, %s36
      %s39 = ssub.s32 %s27, %s34
      %s40 = ssub.s32 %s26, %s38
      %s41 = sor.u32 %s39, %s40
      %p42 = scmp.eq.s32.totalorder %s41, 0
      %s44 = sadd.s32 %s43, 1
      %s45 = scalar_select %p42, %s43, %s44
      %p48 = pneg %p42
      %p49 = scmp.eq.s32.totalorder %s19, 3
      %p50 = por %p48, %p49
      %p51 = scmp.ne.s32.totalorder %s43, %s46
      %p52 = scmp.eq.s32.totalorder %s19, 0
      %p53 = por %p51, %p52
      %p54 = scmp.ne.s32.totalorder %s43, %s46
      %p55 = scmp.eq.s32.totalorder %s24, 3
      %p56 = por %p54, %p55
      %p57 = scmp.ne.s32.totalorder %s46, %s47
      %p58 = scmp.eq.s32.totalorder %s24, 0
      %p59 = por %p57, %p58
      %p60 = scmp.ne.s32.totalorder %s46, %s47
      %p61 = scmp.eq.s32.totalorder %s25, 3
      %p62 = por %p60, %p61
      %p64 = scmp.ne.s32.totalorder %s47, %s63
      %p65 = scmp.eq.s32.totalorder %s25, 0
      %p66 = por %p64, %p65
      %s68 = sadd.s32 %s67, 1
      %p71 = scmp.eq.s32.totalorder %s19, 3
      %p72 = scmp.ne.s32.totalorder %s67, %s69
      %p73 = scmp.eq.s32.totalorder %s19, 0
      %p74 = por %p72, %p73
      %p75 = scmp.ne.s32.totalorder %s67, %s69
      %p76 = scmp.eq.s32.totalorder %s24, 3
      %p77 = por %p75, %p76
      %p78 = scmp.ne.s32.totalorder %s69, %s70
      %p79 = scmp.eq.s32.totalorder %s24, 0
      %p80 = por %p78, %p79
      %p81 = scmp.ne.s32.totalorder %s69, %s70
      %p82 = scmp.eq.s32.totalorder %s25, 3
      %p83 = por %p81, %p82
      %p85 = scmp.ne.s32.totalorder %s70, %s84
      %p86 = scmp.eq.s32.totalorder %s25, 0
      %p87 = por %p85, %p86
      %s89 = sadd.s32 %s88, 1
      %p92 = scmp.eq.s32.totalorder %s19, 3
      %p93 = scmp.ne.s32.totalorder %s88, %s90
      %p94 = scmp.eq.s32.totalorder %s19, 0
      %p95 = por %p93, %p94
      %p96 = scmp.ne.s32.totalorder %s88, %s90
      %p97 = scmp.eq.s32.totalorder %s24, 3
      %p98 = por %p96, %p97
      %p99 = scmp.ne.s32.totalorder %s90, %s91
      %p100 = scmp.eq.s32.totalorder %s24, 0
      %p101 = por %p99, %p100
      %p102 = scmp.ne.s32.totalorder %s90, %s91
      %p103 = scmp.eq.s32.totalorder %s25, 3
      %p104 = por %p102, %p103
      %p106 = scmp.ne.s32.totalorder %s91, %s105
      %p107 = scmp.eq.s32.totalorder %s25, 0
      %p108 = por %p106, %p107
      %s110 = sadd.s32 %s109, 1
      %p113 = scmp.eq.s32.totalorder %s19, 3
      %p114 = scmp.ne.s32.totalorder %s109, %s111
      %p115 = scmp.eq.s32.totalorder %s19, 0
      %p116 = por %p114, %p115
      %p117 = scmp.ne.s32.totalorder %s109, %s111
      %p118 = scmp.eq.s32.totalorder %s24, 3
      %p119 = por %p117, %p118
      %p120 = scmp.ne.s32.totalorder %s111, %s112
      %p121 = scmp.eq.s32.totalorder %s24, 0
      %p122 = por %p120, %p121
      %p123 = scmp.ne.s32.totalorder %s111, %s112
      %p124 = scmp.eq.s32.totalorder %s25, 3
      %p125 = por %p123, %p124
      %p127 = scmp.ne.s32.totalorder %s112, %s126
      %p128 = scmp.eq.s32.totalorder %s25, 0
      %p129 = por %p127, %p128
      %s131 = sadd.s32 %s130, 1
      %p134 = scmp.eq.s32.totalorder %s19, 3
      %p135 = scmp.ne.s32.totalorder %s130, %s132
      %p136 = scmp.eq.s32.totalorder %s19, 0
      %p137 = por %p135, %p136
      %p138 = scmp.ne.s32.totalorder %s130, %s132
      %p139 = scmp.eq.s32.totalorder %s24, 3
      %p140 = por %p138, %p139
      %p141 = scmp.ne.s32.totalorder %s132, %s133
      %p142 = scmp.eq.s32.totalorder %s24, 0
      %p143 = por %p141, %p142
      %p144 = scmp.ne.s32.totalorder %s132, %s133
      %p145 = scmp.eq.s32.totalorder %s25, 3
      %p146 = por %p144, %p145
      %p148 = scmp.ne.s32.totalorder %s133, %s147
      %p149 = scmp.eq.s32.totalorder %s25, 0
      %p150 = por %p148, %p149
      %s151 = ssub.s32 %s27, %s34
      %s152 = ssub.s32 %s26, %s38
      %s153 = sor.u32 %s151, %s152
      %p154 = scmp.eq.s32.totalorder %s153, 0
      %s156 = sadd.s32 %s155, 1
      %s157 = scalar_select %p154, %s155, %s156
      %p160 = pneg %p154
      %p161 = scmp.eq.s32.totalorder %s19, 3
      %p162 = por %p160, %p161
      %p163 = scmp.ne.s32.totalorder %s155, %s158
      %p164 = scmp.eq.s32.totalorder %s19, 0
      %p165 = por %p163, %p164
      %p166 = scmp.ne.s32.totalorder %s155, %s158
      %p167 = scmp.eq.s32.totalorder %s24, 3
      %p168 = por %p166, %p167
      %p169 = scmp.ne.s32.totalorder %s158, %s159
      %p170 = scmp.eq.s32.totalorder %s24, 0
      %p171 = por %p169, %p170
      %p172 = scmp.ne.s32.totalorder %s158, %s159
      %p173 = scmp.eq.s32.totalorder %s25, 3
      %p174 = por %p172, %p173
      %p176 = scmp.ne.s32.totalorder %s159, %s175
      %p177 = scmp.eq.s32.totalorder %s25, 0
      %p178 = por %p176, %p177
      %p179 = scmp.le.s32.totalorder 1, %s19
      %p180 = scmp.lt.s32.totalorder %s19, 5
      %p181 = pnand %p179, %p180
      %p182 = pneg %p181
      // Predicated region
      $region9: #{tpu_custom_call.1} parent=5 // pred_check
        _
      $region10: #{tpu_custom_call.1} parent=5 // pred_check_branch
        %184 = sbr.rel (%p181) target = $region12
      $region11: #{tpu_custom_call.1} parent=5 // pred_region
        %s185 = ssub.s32 %s19, 1
        // Predicated region
        $region13: #{tpu_custom_call.1} parent=11 // pred_check
          %p186 = pneg %p80
        $region14: #{tpu_custom_call.1} parent=11 // pred_check_branch
          %188 = sbr.rel (%p186) target = $region16
        $region15: #{tpu_custom_call.1} parent=11 // pred_region
          %s190 = ssub.s32 4096, 4096
          %191 = vsyncadd [#allocation8], %s190
          %s192 = sshll.u32 [#allocation7], 4
          %s193 = int_to_ptr.vmem [resolvable:$true] %s192
          %198 = dma.hbm_to_vmem [thread:$0]  %s1, 4096, %s193, [#allocation8], 256, 256, 16
        $region16: #{tpu_custom_call.1} parent=11 // pred_fallthru
          _
        // Predicated region
        $region17: #{tpu_custom_call.1} parent=11 // pred_check
          %p199 = pneg %p101
        $region18: #{tpu_custom_call.1} parent=11 // pred_check_branch
          %201 = sbr.rel (%p199) target = $region20
        $region19: #{tpu_custom_call.1} parent=11 // pred_region
          %s203 = ssub.s32 64, 64
          %204 = vsyncadd [#allocation8], %s203
          %s206 = sshll.u32 [#allocation9], 4
          %s207 = int_to_ptr.vmem [resolvable:$true] %s206
          %209 = dma.hbm_to_vmem [thread:$0]  %s2, 64, %s207, [#allocation8]
        $region20: #{tpu_custom_call.1} parent=11 // pred_fallthru
          _
        // Predicated region
        $region21: #{tpu_custom_call.1} parent=11 // pred_check
          %p210 = pneg %p122
        $region22: #{tpu_custom_call.1} parent=11 // pred_check_branch
          %212 = sbr.rel (%p210) target = $region24
        $region23: #{tpu_custom_call.1} parent=11 // pred_region
          %s214 = ssub.s32 4096, 4096
          %215 = vsyncadd [#allocation11], %s214
          %s216 = sshll.u32 [#allocation10], 4
          %s217 = int_to_ptr.vmem [resolvable:$true] %s216
          %222 = dma.hbm_to_vmem [thread:$0]  %s3, 4096, %s217, [#allocation11], 64, 64, 4
        $region24: #{tpu_custom_call.1} parent=11 // pred_fallthru
          _
        // Predicated region
        $region25: #{tpu_custom_call.1} parent=11 // pred_check
          %p223 = pneg %p143
        $region26: #{tpu_custom_call.1} parent=11 // pred_check_branch
          %225 = sbr.rel (%p223) target = $region28
        $region27: #{tpu_custom_call.1} parent=11 // pred_region
          _
        $region28: #{tpu_custom_call.1} parent=11 // pred_fallthru
          _
      $region12: #{tpu_custom_call.1} parent=5 // pred_fallthru
        _
      %p226 = scmp.lt.s32.totalorder %s19, 4
      // Predicated region
      $region29: #{tpu_custom_call.1} parent=5 // pred_check
        %p227 = pneg %p226
      $region30: #{tpu_custom_call.1} parent=5 // pred_check_branch
        %229 = sbr.rel (%p227) target = $region32
      $region31: #{tpu_custom_call.1} parent=5 // pred_region
        // Predicated region
        $region33: #{tpu_custom_call.1} parent=31 // pred_check
          %p230 = pneg %p53
        $region34: #{tpu_custom_call.1} parent=31 // pred_check_branch
          %232 = sbr.rel (%p230) target = $region36
        $region35: #{tpu_custom_call.1} parent=31 // pred_region
          %s233 = sand.u32 %s43, 1
          %s234 = scalar_lea.sflag [#allocation5], %s233
          %s235 = sand.u32 %s43, 1
          %s236 = smul.addr %s235, 128
          %s237 = scalar_lea.vmem [#allocation4], %s236
          %s238 = smul.u32 16, %s26
          %s240 = ssub.s32 2048, 2048
          %241 = vsyncadd %s234, %s240
          %s242 = smul.addr %s27, 16
          %s243 = sadd.s32 %s238, %s242
          %s244 = smul.addr %s243, 128
          %s245 = scalar_lea.hbm %s0, %s244
          %s246 = sshll.u32 %s237, 4
          %s247 = int_to_ptr.vmem [resolvable:$true] %s246
          %252 = dma.hbm_to_vmem [thread:$0]  %s245, 2048, %s247, %s234, 128, 128, 8
        $region36: #{tpu_custom_call.1} parent=31 // pred_fallthru
          _
      $region32: #{tpu_custom_call.1} parent=5 // pred_fallthru
        _
      %p253 = scmp.le.s32.totalorder 1, %s19
      %p254 = scmp.lt.s32.totalorder %s19, 5
      %p255 = pnand %p253, %p254
      %p256 = pneg %p255
      // Predicated region
      $region37: #{tpu_custom_call.1} parent=5 // pred_check
        _
      $region38: #{tpu_custom_call.1} parent=5 // pred_check_branch
        %258 = sbr.rel (%p255) target = $region40
      $region39: #{tpu_custom_call.1} parent=5 // pred_region
        %s259 = ssub.s32 %s19, 1
        %s260 = sand.u32 %s46, 1
        %s261 = scalar_lea.sflag [#allocation5], %s260
        %s262 = sand.u32 %s46, 1
        %s263 = smul.addr %s262, 128
        %s264 = scalar_lea.vmem [#allocation4], %s263
        // Predicated region
        $region41: #{tpu_custom_call.1} parent=39 // pred_check
          %p265 = pneg %p59
        $region42: #{tpu_custom_call.1} parent=39 // pred_check_branch
          %267 = sbr.rel (%p265) target = $region44
        $region43: #{tpu_custom_call.1} parent=39 // pred_region
          %268 = dma.done %s261, 2048
        $region44: #{tpu_custom_call.1} parent=39 // pred_fallthru
          _
        // Predicated region
        $region45: #{tpu_custom_call.1} parent=39 // pred_check
          %p269 = pneg %p80
        $region46: #{tpu_custom_call.1} parent=39 // pred_check_branch
          %271 = sbr.rel (%p269) target = $region48
        $region47: #{tpu_custom_call.1} parent=39 // pred_region
          %272 = dma.done [#allocation8], 4096
        $region48: #{tpu_custom_call.1} parent=39 // pred_fallthru
          _
        // Predicated region
        $region49: #{tpu_custom_call.1} parent=39 // pred_check
          %p273 = pneg %p101
        $region50: #{tpu_custom_call.1} parent=39 // pred_check_branch
          %275 = sbr.rel (%p273) target = $region52
        $region51: #{tpu_custom_call.1} parent=39 // pred_region
          %276 = dma.done [#allocation8], 64
        $region52: #{tpu_custom_call.1} parent=39 // pred_fallthru
          _
        // Predicated region
        $region53: #{tpu_custom_call.1} parent=39 // pred_check
          %p277 = pneg %p122
        $region54: #{tpu_custom_call.1} parent=39 // pred_check_branch
          %279 = sbr.rel (%p277) target = $region56
        $region55: #{tpu_custom_call.1} parent=39 // pred_region
          %280 = dma.done [#allocation11], 4096
        $region56: #{tpu_custom_call.1} parent=39 // pred_fallthru
          _
        %s281 = sand.u32 %s46, 1
        %s282 = scalar_lea.sflag [#allocation5], %s281
        %s283 = sand.u32 %s46, 1
        %s284 = smul.addr %s283, 128
        %s285 = scalar_lea.vmem [#allocation4], %s284
        %p286 = pneg %p59
        %p287 = pneg %p56
        %p288 = pneg %p80
        %p289 = pneg %p77
        %p290 = pneg %p101
        %p291 = pneg %p98
        %p292 = pneg %p122
        %p293 = pneg %p119
        %p294 = pneg %p143
        %p295 = pneg %p140
        %p296 = pneg %p171
        %p297 = pneg %p168
        %s298 = sand.u32 %s158, 1
        %s299 = scalar_lea.sflag [#allocation6], %s298
        %s300 = sand.u32 %s158, 1
        %s301 = smul.addr %s300, 128
        %s302 = scalar_lea.vmem [#allocation12], %s301
        %s303 = smul.u32 16, %s28
        %s304 = smul.u32 16, %s28
        %p306 = scmp.eq.s32.totalorder %s29, 0
        // Predicated region
        $region57: #{tpu_custom_call.1} parent=39 // pred_check
          %p307 = pneg %p306
        $region58: #{tpu_custom_call.1} parent=39 // pred_check_branch
          %309 = sbr.rel (%p307) target = $region60
        $region59: #{tpu_custom_call.1} parent=39 // pred_region
          %310 = vst [vmem:[#allocation2] sm:$0xff] 0.0
          %311 = vst [vmem:[#allocation2 + $0x8] sm:$0xff] 0.0
          %312 = vst [vmem:[#allocation2 + $0x10] sm:$0xff] 0.0
          %313 = vst [vmem:[#allocation2 + $0x18] sm:$0xff] 0.0
          %314 = vst [vmem:[#allocation2 + $0x20] sm:$0xff] 0.0
          %315 = vst [vmem:[#allocation2 + $0x28] sm:$0xff] 0.0
          %316 = vst [vmem:[#allocation2 + $0x30] sm:$0xff] 0.0
          %317 = vst [vmem:[#allocation2 + $0x38] sm:$0xff] 0.0
          %318 = vst [vmem:[#allocation2 + $0x40] sm:$0xff] 0.0
          %319 = vst [vmem:[#allocation2 + $0x48] sm:$0xff] 0.0
          %320 = vst [vmem:[#allocation2 + $0x50] sm:$0xff] 0.0
          %321 = vst [vmem:[#allocation2 + $0x58] sm:$0xff] 0.0
          %322 = vst [vmem:[#allocation2 + $0x60] sm:$0xff] 0.0
          %323 = vst [vmem:[#allocation2 + $0x68] sm:$0xff] 0.0
          %324 = vst [vmem:[#allocation2 + $0x70] sm:$0xff] 0.0
          %325 = vst [vmem:[#allocation2 + $0x78] sm:$0xff] 0.0
          %326 = vst [vmem:[#allocation3] sm:$0xff] 0.0
          %327 = vst [vmem:[#allocation3 + $0x8] sm:$0xff] 0.0
          %328 = vst [vmem:[#allocation3 + $0x10] sm:$0xff] 0.0
          %329 = vst [vmem:[#allocation3 + $0x18] sm:$0xff] 0.0
          %330 = vst [vmem:[#allocation3 + $0x20] sm:$0xff] 0.0
          %331 = vst [vmem:[#allocation3 + $0x28] sm:$0xff] 0.0
          %332 = vst [vmem:[#allocation3 + $0x30] sm:$0xff] 0.0
          %333 = vst [vmem:[#allocation3 + $0x38] sm:$0xff] 0.0
          %334 = vst [vmem:[#allocation3 + $0x40] sm:$0xff] 0.0
          %335 = vst [vmem:[#allocation3 + $0x48] sm:$0xff] 0.0
          %336 = vst [vmem:[#allocation3 + $0x50] sm:$0xff] 0.0
          %337 = vst [vmem:[#allocation3 + $0x58] sm:$0xff] 0.0
          %338 = vst [vmem:[#allocation3 + $0x60] sm:$0xff] 0.0
          %339 = vst [vmem:[#allocation3 + $0x68] sm:$0xff] 0.0
          %340 = vst [vmem:[#allocation3 + $0x70] sm:$0xff] 0.0
          %341 = vst [vmem:[#allocation3 + $0x78] sm:$0xff] 0.0
          %342 = vst [vmem:[#allocation3 + $0x80] sm:$0xff] 0.0
          %343 = vst [vmem:[#allocation3 + $0x88] sm:$0xff] 0.0
          %344 = vst [vmem:[#allocation3 + $0x90] sm:$0xff] 0.0
          %345 = vst [vmem:[#allocation3 + $0x98] sm:$0xff] 0.0
          %346 = vst [vmem:[#allocation3 + $0xa0] sm:$0xff] 0.0
          %347 = vst [vmem:[#allocation3 + $0xa8] sm:$0xff] 0.0
          %348 = vst [vmem:[#allocation3 + $0xb0] sm:$0xff] 0.0
          %349 = vst [vmem:[#allocation3 + $0xb8] sm:$0xff] 0.0
          %350 = vst [vmem:[#allocation3 + $0xc0] sm:$0xff] 0.0
          %351 = vst [vmem:[#allocation3 + $0xc8] sm:$0xff] 0.0
          %352 = vst [vmem:[#allocation3 + $0xd0] sm:$0xff] 0.0
          %353 = vst [vmem:[#allocation3 + $0xd8] sm:$0xff] 0.0
          %354 = vst [vmem:[#allocation3 + $0xe0] sm:$0xff] 0.0
          %355 = vst [vmem:[#allocation3 + $0xe8] sm:$0xff] 0.0
          %356 = vst [vmem:[#allocation3 + $0xf0] sm:$0xff] 0.0
          %357 = vst [vmem:[#allocation3 + $0xf8] sm:$0xff] 0.0
          %358 = vst [vmem:[#allocation3 + $0x100] sm:$0xff] 0.0
          %359 = vst [vmem:[#allocation3 + $0x108] sm:$0xff] 0.0
          %360 = vst [vmem:[#allocation3 + $0x110] sm:$0xff] 0.0
          %361 = vst [vmem:[#allocation3 + $0x118] sm:$0xff] 0.0
          %362 = vst [vmem:[#allocation3 + $0x120] sm:$0xff] 0.0
          %363 = vst [vmem:[#allocation3 + $0x128] sm:$0xff] 0.0
          %364 = vst [vmem:[#allocation3 + $0x130] sm:$0xff] 0.0
          %365 = vst [vmem:[#allocation3 + $0x138] sm:$0xff] 0.0
          %366 = vst [vmem:[#allocation3 + $0x140] sm:$0xff] 0.0
          %367 = vst [vmem:[#allocation3 + $0x148] sm:$0xff] 0.0
          %368 = vst [vmem:[#allocation3 + $0x150] sm:$0xff] 0.0
          %369 = vst [vmem:[#allocation3 + $0x158] sm:$0xff] 0.0
          %370 = vst [vmem:[#allocation3 + $0x160] sm:$0xff] 0.0
          %371 = vst [vmem:[#allocation3 + $0x168] sm:$0xff] 0.0
          %372 = vst [vmem:[#allocation3 + $0x170] sm:$0xff] 0.0
          %373 = vst [vmem:[#allocation3 + $0x178] sm:$0xff] 0.0
          %374 = vst [vmem:[#allocation3 + $0x180] sm:$0xff] 0.0
          %375 = vst [vmem:[#allocation3 + $0x188] sm:$0xff] 0.0
          %376 = vst [vmem:[#allocation3 + $0x190] sm:$0xff] 0.0
          %377 = vst [vmem:[#allocation3 + $0x198] sm:$0xff] 0.0
          %378 = vst [vmem:[#allocation3 + $0x1a0] sm:$0xff] 0.0
          %379 = vst [vmem:[#allocation3 + $0x1a8] sm:$0xff] 0.0
          %380 = vst [vmem:[#allocation3 + $0x1b0] sm:$0xff] 0.0
          %381 = vst [vmem:[#allocation3 + $0x1b8] sm:$0xff] 0.0
          %382 = vst [vmem:[#allocation3 + $0x1c0] sm:$0xff] 0.0
          %383 = vst [vmem:[#allocation3 + $0x1c8] sm:$0xff] 0.0
          %384 = vst [vmem:[#allocation3 + $0x1d0] sm:$0xff] 0.0
          %385 = vst [vmem:[#allocation3 + $0x1d8] sm:$0xff] 0.0
          %386 = vst [vmem:[#allocation3 + $0x1e0] sm:$0xff] 0.0
          %387 = vst [vmem:[#allocation3 + $0x1e8] sm:$0xff] 0.0
          %388 = vst [vmem:[#allocation3 + $0x1f0] sm:$0xff] 0.0
          %389 = vst [vmem:[#allocation3 + $0x1f8] sm:$0xff] 0.0
        $region60: #{tpu_custom_call.1} parent=39 // pred_fallthru
          _
        %v390 = vld [vmem:[%s264] sm:$0xff]
        %v391 = vld [vmem:[%s264 + $0x8] sm:$0xff]
        %v392 = vld [vmem:[%s264 + $0x10] sm:$0xff]
        %v393 = vld [vmem:[%s264 + $0x18] sm:$0xff]
        %v394 = vld [vmem:[%s264 + $0x20] sm:$0xff]
        %v395 = vld [vmem:[%s264 + $0x28] sm:$0xff]
        %v396 = vld [vmem:[%s264 + $0x30] sm:$0xff]
        %v397 = vld [vmem:[%s264 + $0x38] sm:$0xff]
        %v398 = vld [vmem:[%s264 + $0x40] sm:$0xff]
        %v399 = vld [vmem:[%s264 + $0x48] sm:$0xff]
        %v400 = vld [vmem:[%s264 + $0x50] sm:$0xff]
        %v401 = vld [vmem:[%s264 + $0x58] sm:$0xff]
        %v402 = vld [vmem:[%s264 + $0x60] sm:$0xff]
        %v403 = vld [vmem:[%s264 + $0x68] sm:$0xff]
        %v404 = vld [vmem:[%s264 + $0x70] sm:$0xff]
        %v405 = vld [vmem:[%s264 + $0x78] sm:$0xff]
        %v406 = vld [vmem:[#allocation2] sm:$0xff]
        %v407 = vld [vmem:[#allocation2 + $0x8] sm:$0xff]
        %v408 = vld [vmem:[#allocation2 + $0x10] sm:$0xff]
        %v409 = vld [vmem:[#allocation2 + $0x18] sm:$0xff]
        %v410 = vld [vmem:[#allocation2 + $0x20] sm:$0xff]
        %v411 = vld [vmem:[#allocation2 + $0x28] sm:$0xff]
        %v412 = vld [vmem:[#allocation2 + $0x30] sm:$0xff]
        %v413 = vld [vmem:[#allocation2 + $0x38] sm:$0xff]
        %v414 = vld [vmem:[#allocation2 + $0x40] sm:$0xff]
        %v415 = vld [vmem:[#allocation2 + $0x48] sm:$0xff]
        %v416 = vld [vmem:[#allocation2 + $0x50] sm:$0xff]
        %v417 = vld [vmem:[#allocation2 + $0x58] sm:$0xff]
        %v418 = vld [vmem:[#allocation2 + $0x60] sm:$0xff]
        %v419 = vld [vmem:[#allocation2 + $0x68] sm:$0xff]
        %v420 = vld [vmem:[#allocation2 + $0x70] sm:$0xff]
        %v421 = vld [vmem:[#allocation2 + $0x78] sm:$0xff]
        %v422 = vadd.f32 %v390, %v406
        %v423 = vadd.f32 %v391, %v407
        %v424 = vadd.f32 %v392, %v408
        %v425 = vadd.f32 %v393, %v409
        %v426 = vadd.f32 %v394, %v410
        %v427 = vadd.f32 %v395, %v411
        %v428 = vadd.f32 %v396, %v412
        %v429 = vadd.f32 %v397, %v413
        %v430 = vadd.f32 %v398, %v414
        %v431 = vadd.f32 %v399, %v415
        %v432 = vadd.f32 %v400, %v416
        %v433 = vadd.f32 %v401, %v417
        %v434 = vadd.f32 %v402, %v418
        %v435 = vadd.f32 %v403, %v419
        %v436 = vadd.f32 %v404, %v420
        %v437 = vadd.f32 %v405, %v421
        %v438 = vmul.f32 %v422, 0.5
        %v439 = vmul.f32 %v423, 0.5
        %v440 = vmul.f32 %v424, 0.5
        %v441 = vmul.f32 %v425, 0.5
        %v442 = vmul.f32 %v426, 0.5
        %v443 = vmul.f32 %v427, 0.5
        %v444 = vmul.f32 %v428, 0.5
        %v445 = vmul.f32 %v429, 0.5
        %v446 = vmul.f32 %v430, 0.5
        %v447 = vmul.f32 %v431, 0.5
        %v448 = vmul.f32 %v432, 0.5
        %v449 = vmul.f32 %v433, 0.5
        %v450 = vmul.f32 %v434, 0.5
        %v451 = vmul.f32 %v435, 0.5
        %v452 = vmul.f32 %v436, 0.5
        %v453 = vmul.f32 %v437, 0.5
        %vm454 = vcmp.ge.f32.partialorder %v438, 1.0
        %vm455 = vcmp.ge.f32.partialorder %v439, 1.0
        %vm456 = vcmp.ge.f32.partialorder %v440, 1.0
        %vm457 = vcmp.ge.f32.partialorder %v441, 1.0
        %vm458 = vcmp.ge.f32.partialorder %v442, 1.0
        %vm459 = vcmp.ge.f32.partialorder %v443, 1.0
        %vm460 = vcmp.ge.f32.partialorder %v444, 1.0
        %vm461 = vcmp.ge.f32.partialorder %v445, 1.0
        %vm462 = vcmp.ge.f32.partialorder %v446, 1.0
        %vm463 = vcmp.ge.f32.partialorder %v447, 1.0
        %vm464 = vcmp.ge.f32.partialorder %v448, 1.0
        %vm465 = vcmp.ge.f32.partialorder %v449, 1.0
        %vm466 = vcmp.ge.f32.partialorder %v450, 1.0
        %vm467 = vcmp.ge.f32.partialorder %v451, 1.0
        %vm468 = vcmp.ge.f32.partialorder %v452, 1.0
        %vm469 = vcmp.ge.f32.partialorder %v453, 1.0
        %v470 = vsel %vm454, 0.0, %v438
        %v471 = vsel %vm455, 0.0, %v439
        %v472 = vsel %vm456, 0.0, %v440
        %v473 = vsel %vm457, 0.0, %v441
        %v474 = vsel %vm458, 0.0, %v442
        %v475 = vsel %vm459, 0.0, %v443
        %v476 = vsel %vm460, 0.0, %v444
        %v477 = vsel %vm461, 0.0, %v445
        %v478 = vsel %vm462, 0.0, %v446
        %v479 = vsel %vm463, 0.0, %v447
        %v480 = vsel %vm464, 0.0, %v448
        %v481 = vsel %vm465, 0.0, %v449
        %v482 = vsel %vm466, 0.0, %v450
        %v483 = vsel %vm467, 0.0, %v451
        %v484 = vsel %vm468, 0.0, %v452
        %v485 = vsel %vm469, 0.0, %v453
        %486 = vst [vmem:[#allocation2] sm:$0xff] %v470
        %487 = vst [vmem:[#allocation2 + $0x8] sm:$0xff] %v471
        %488 = vst [vmem:[#allocation2 + $0x10] sm:$0xff] %v472
        %489 = vst [vmem:[#allocation2 + $0x18] sm:$0xff] %v473
        %490 = vst [vmem:[#allocation2 + $0x20] sm:$0xff] %v474
        %491 = vst [vmem:[#allocation2 + $0x28] sm:$0xff] %v475
        %492 = vst [vmem:[#allocation2 + $0x30] sm:$0xff] %v476
        %493 = vst [vmem:[#allocation2 + $0x38] sm:$0xff] %v477
        %494 = vst [vmem:[#allocation2 + $0x40] sm:$0xff] %v478
        %495 = vst [vmem:[#allocation2 + $0x48] sm:$0xff] %v479
        %496 = vst [vmem:[#allocation2 + $0x50] sm:$0xff] %v480
        %497 = vst [vmem:[#allocation2 + $0x58] sm:$0xff] %v481
        %498 = vst [vmem:[#allocation2 + $0x60] sm:$0xff] %v482
        %499 = vst [vmem:[#allocation2 + $0x68] sm:$0xff] %v483
        %500 = vst [vmem:[#allocation2 + $0x70] sm:$0xff] %v484
        %501 = vst [vmem:[#allocation2 + $0x78] sm:$0xff] %v485
        %v502 = vsel %vm454, 1, 0
        %v503 = vsel %vm455, 1, 0
        %v504 = vsel %vm456, 1, 0
        %v505 = vsel %vm457, 1, 0
        %v506 = vsel %vm458, 1, 0
        %v507 = vsel %vm459, 1, 0
        %v508 = vsel %vm460, 1, 0
        %v509 = vsel %vm461, 1, 0
        %v510 = vsel %vm462, 1, 0
        %v511 = vsel %vm463, 1, 0
        %v512 = vsel %vm464, 1, 0
        %v513 = vsel %vm465, 1, 0
        %v514 = vsel %vm466, 1, 0
        %v515 = vsel %vm467, 1, 0
        %v516 = vsel %vm468, 1, 0
        %v517 = vsel %vm469, 1, 0
        %v518 = vcvt.s32.f32 %v502
        %v519 = vcvt.s32.f32 %v503
        %v520 = vcvt.s32.f32 %v504
        %v521 = vcvt.s32.f32 %v505
        %v522 = vcvt.s32.f32 %v506
        %v523 = vcvt.s32.f32 %v507
        %v524 = vcvt.s32.f32 %v508
        %v525 = vcvt.s32.f32 %v509
        %v526 = vcvt.s32.f32 %v510
        %v527 = vcvt.s32.f32 %v511
        %v528 = vcvt.s32.f32 %v512
        %v529 = vcvt.s32.f32 %v513
        %v530 = vcvt.s32.f32 %v514
        %v531 = vcvt.s32.f32 %v515
        %v532 = vcvt.s32.f32 %v516
        %v533 = vcvt.s32.f32 %v517
        %v534 = vpack.c.bf16 %v519, %v518
        %v535 = vpack.c.bf16 %v521, %v520
        %v536 = vpack.c.bf16 %v523, %v522
        %v537 = vpack.c.bf16 %v525, %v524
        %v538 = vpack.c.bf16 %v527, %v526
        %v539 = vpack.c.bf16 %v529, %v528
        %v540 = vpack.c.bf16 %v531, %v530
        %v541 = vpack.c.bf16 %v533, %v532
        %v542 = vld [vmem:[#allocation7] sm:$0xff]
        %v543 = vld [vmem:[#allocation7 + $0x8] sm:$0xff]
        %v544 = vld [vmem:[#allocation7 + $0x10] sm:$0xff]
        %v545 = vld [vmem:[#allocation7 + $0x18] sm:$0xff]
        %v546 = vld [vmem:[#allocation7 + $0x20] sm:$0xff]
        %v547 = vld [vmem:[#allocation7 + $0x28] sm:$0xff]
        %v548 = vld [vmem:[#allocation7 + $0x30] sm:$0xff]
        %v549 = vld [vmem:[#allocation7 + $0x38] sm:$0xff]
        %v550 = vld [vmem:[#allocation7 + $0x40] sm:$0xff]
        %v551 = vld [vmem:[#allocation7 + $0x48] sm:$0xff]
        %v552 = vld [vmem:[#allocation7 + $0x50] sm:$0xff]
        %v553 = vld [vmem:[#allocation7 + $0x58] sm:$0xff]
        %v554 = vld [vmem:[#allocation7 + $0x60] sm:$0xff]
        %v555 = vld [vmem:[#allocation7 + $0x68] sm:$0xff]
        %v556 = vld [vmem:[#allocation7 + $0x70] sm:$0xff]
        %v557 = vld [vmem:[#allocation7 + $0x78] sm:$0xff]
        %v558 = vld [vmem:[#allocation7 + $0x80] sm:$0xff]
        %v559 = vld [vmem:[#allocation7 + $0x88] sm:$0xff]
        %v560 = vld [vmem:[#allocation7 + $0x90] sm:$0xff]
        %v561 = vld [vmem:[#allocation7 + $0x98] sm:$0xff]
        %v562 = vld [vmem:[#allocation7 + $0xa0] sm:$0xff]
        %v563 = vld [vmem:[#allocation7 + $0xa8] sm:$0xff]
        %v564 = vld [vmem:[#allocation7 + $0xb0] sm:$0xff]
        %v565 = vld [vmem:[#allocation7 + $0xb8] sm:$0xff]
        %v566 = vld [vmem:[#allocation7 + $0xc0] sm:$0xff]
        %v567 = vld [vmem:[#allocation7 + $0xc8] sm:$0xff]
        %v568 = vld [vmem:[#allocation7 + $0xd0] sm:$0xff]
        %v569 = vld [vmem:[#allocation7 + $0xd8] sm:$0xff]
        %v570 = vld [vmem:[#allocation7 + $0xe0] sm:$0xff]
        %v571 = vld [vmem:[#allocation7 + $0xe8] sm:$0xff]
        %v572 = vld [vmem:[#allocation7 + $0xf0] sm:$0xff]
        %v573 = vld [vmem:[#allocation7 + $0xf8] sm:$0xff]
        %v574 = vld [vmem:[#allocation9] sm:$0xf]
        %v576 = vlaneseq
        %v577 = vshrl.u32 %v576, 7
        %v578 = vsub.s32 0, %v577
        %v579 = vrot.slane %v574, %v578
        %v580 = vlaneseq
        %v581 = vshrl.u32 %v580, 7
        %v582 = vsub.s32 1, %v581
        %v583 = vrot.slane %v574, %v582
        %v584 = vlaneseq
        %v585 = vshrl.u32 %v584, 7
        %v586 = vsub.s32 2, %v585
        %v587 = vrot.slane %v574, %v586
        %v588 = vlaneseq
        %v589 = vshrl.u32 %v588, 7
        %v590 = vsub.s32 3, %v589
        %v591 = vrot.slane %v574, %v590
        %v628 = vunpack.c.l.b16 %v542
        %v629 = vunpack.c.h.b16 %v542
        %v630 = vunpack.c.l.b16 %v543
        %v631 = vunpack.c.h.b16 %v543
        %v632 = vunpack.c.l.b16 %v544
        %v633 = vunpack.c.h.b16 %v544
        %v634 = vunpack.c.l.b16 %v545
        %v635 = vunpack.c.h.b16 %v545
        %v636 = vunpack.c.l.b16 %v546
        %v637 = vunpack.c.h.b16 %v546
        %v638 = vunpack.c.l.b16 %v547
        %v639 = vunpack.c.h.b16 %v547
        %v640 = vunpack.c.l.b16 %v548
        %v641 = vunpack.c.h.b16 %v548
        %v642 = vunpack.c.l.b16 %v549
        %v643 = vunpack.c.h.b16 %v549
        %v644 = vunpack.c.l.b16 %v550
        %v645 = vunpack.c.h.b16 %v550
        %v646 = vunpack.c.l.b16 %v551
        %v647 = vunpack.c.h.b16 %v551
        %v648 = vunpack.c.l.b16 %v552
        %v649 = vunpack.c.h.b16 %v552
        %v650 = vunpack.c.l.b16 %v553
        %v651 = vunpack.c.h.b16 %v553
        %v652 = vunpack.c.l.b16 %v554
        %v653 = vunpack.c.h.b16 %v554
        %v654 = vunpack.c.l.b16 %v555
        %v655 = vunpack.c.h.b16 %v555
        %v656 = vunpack.c.l.b16 %v556
        %v657 = vunpack.c.h.b16 %v556
        %v658 = vunpack.c.l.b16 %v557
        %v659 = vunpack.c.h.b16 %v557
        %v660 = vunpack.c.l.b16 %v558
        %v661 = vunpack.c.h.b16 %v558
        %v662 = vunpack.c.l.b16 %v559
        %v663 = vunpack.c.h.b16 %v559
        %v664 = vunpack.c.l.b16 %v560
        %v665 = vunpack.c.h.b16 %v560
        %v666 = vunpack.c.l.b16 %v561
        %v667 = vunpack.c.h.b16 %v561
        %v668 = vunpack.c.l.b16 %v562
        %v669 = vunpack.c.h.b16 %v562
        %v670 = vunpack.c.l.b16 %v563
        %v671 = vunpack.c.h.b16 %v563
        %v672 = vunpack.c.l.b16 %v564
        %v673 = vunpack.c.h.b16 %v564
        %v674 = vunpack.c.l.b16 %v565
        %v675 = vunpack.c.h.b16 %v565
        %v676 = vunpack.c.l.b16 %v566
        %v677 = vunpack.c.h.b16 %v566
        %v678 = vunpack.c.l.b16 %v567
        %v679 = vunpack.c.h.b16 %v567
        %v680 = vunpack.c.l.b16 %v568
        %v681 = vunpack.c.h.b16 %v568
        %v682 = vunpack.c.l.b16 %v569
        %v683 = vunpack.c.h.b16 %v569
        %v684 = vunpack.c.l.b16 %v570
        %v685 = vunpack.c.h.b16 %v570
        %v686 = vunpack.c.l.b16 %v571
        %v687 = vunpack.c.h.b16 %v571
        %v688 = vunpack.c.l.b16 %v572
        %v689 = vunpack.c.h.b16 %v572
        %v690 = vunpack.c.l.b16 %v573
        %v691 = vunpack.c.h.b16 %v573
        %v692 = vpack.c.b16 %v632, %v628
        %v693 = vpack.c.b16 %v633, %v629
        %v694 = vpack.c.b16 %v634, %v630
        %v695 = vpack.c.b16 %v635, %v631
        %v696 = vpack.c.b16 %v640, %v636
        %v697 = vpack.c.b16 %v641, %v637
        %v698 = vpack.c.b16 %v642, %v638
        %v699 = vpack.c.b16 %v643, %v639
        %v700 = vpack.c.b16 %v648, %v644
        %v701 = vpack.c.b16 %v649, %v645
        %v702 = vpack.c.b16 %v650, %v646
        %v703 = vpack.c.b16 %v651, %v647
        %v704 = vpack.c.b16 %v656, %v652
        %v705 = vpack.c.b16 %v657, %v653
        %v706 = vpack.c.b16 %v658, %v654
        %v707 = vpack.c.b16 %v659, %v655
        %v708 = vpack.c.b16 %v664, %v660
        %v709 = vpack.c.b16 %v665, %v661
        %v710 = vpack.c.b16 %v666, %v662
        %v711 = vpack.c.b16 %v667, %v663
        %v712 = vpack.c.b16 %v672, %v668
        %v713 = vpack.c.b16 %v673, %v669
        %v714 = vpack.c.b16 %v674, %v670
        %v715 = vpack.c.b16 %v675, %v671
        %v716 = vpack.c.b16 %v680, %v676
        %v717 = vpack.c.b16 %v681, %v677
        %v718 = vpack.c.b16 %v682, %v678
        %v719 = vpack.c.b16 %v683, %v679
        %v720 = vpack.c.b16 %v688, %v684
        %v721 = vpack.c.b16 %v689, %v685
        %v722 = vpack.c.b16 %v690, %v686
        %v723 = vpack.c.b16 %v691, %v687
        %756 = vmatprep.subr.bf16.mxu0 %v721
        %757 = vmatpush1.bf16.msra.mxu0 %v720
        %758 = vmatprep.subr.bf16.mxu0 %v717
        %759 = vmatpush1.bf16.msra.mxu0 %v716
        %760 = vmatprep.subr.bf16.mxu0 %v713
        %761 = vmatpush1.bf16.msra.mxu0 %v712
        %762 = vmatprep.subr.bf16.mxu0 %v709
        %763 = vmatpush1.bf16.msra.mxu0 %v708
        %764 = vmatprep.subr.bf16.mxu0 %v705
        %765 = vmatpush1.bf16.msra.mxu0 %v704
        %766 = vmatprep.subr.bf16.mxu0 %v701
        %767 = vmatpush1.bf16.msra.mxu0 %v700
        %768 = vmatprep.subr.bf16.mxu0 %v697
        %769 = vmatpush1.bf16.msra.mxu0 %v696
        %770 = vmatprep.subr.bf16.mxu0 %v693
        %771 = vmatpush1.bf16.msra.mxu0 %v692
        %772 = vmatprep.subr.bf16.mxu0 0
        %773 = vmatpush2.bf16.msra.mxu0 0
        %774 = vmatprep.subr.bf16.mxu0 0
        %775 = vmatpush2.bf16.msra.mxu0 0
        %776 = vmatprep.subr.bf16.mxu0 0
        %777 = vmatpush2.bf16.msra.mxu0 0
        %778 = vmatprep.subr.bf16.mxu0 0
        %779 = vmatpush2.bf16.msra.mxu0 0
        %780 = vmatprep.subr.bf16.mxu0 0
        %781 = vmatpush2.bf16.msra.mxu0 0
        %782 = vmatprep.subr.bf16.mxu0 0
        %783 = vmatpush2.bf16.msra.mxu0 0
        %784 = vmatprep.subr.bf16.mxu0 0
        %785 = vmatpush2.bf16.msra.mxu0 0
        %786 = vmatprep.subr.bf16.mxu0 0
        %787 = vmatpush2.bf16.msra.mxu0 0
        %788 = vmatprep.mubr.bf16.mxu0 0
        %789 = vmatmul.mubr.bf16.gmra.mxu0 %v534
        %v790 = vpop.f32.mrf.mxu0
        %v791 = vadd.f32 %v579, %v790
        %v792 = vpop.f32.mrf.mxu0
        %v793 = vadd.f32 %v583, %v792
        %v794 = vpop.f32.mrf.mxu0
        %v795 = vadd.f32 %v579, %v794
        %v796 = vpop.f32.mrf.mxu0
        %v797 = vadd.f32 %v583, %v796
        %798 = vmatprep.mubr.bf16.mxu0 0
        %799 = vmatmul.mubr.bf16.gmra.mxu0 %v535
        %v800 = vpop.f32.mrf.mxu0
        %v801 = vadd.f32 %v579, %v800
        %v802 = vpop.f32.mrf.mxu0
        %v803 = vadd.f32 %v583, %v802
        %v804 = vpop.f32.mrf.mxu0
        %v805 = vadd.f32 %v579, %v804
        %v806 = vpop.f32.mrf.mxu0
        %v807 = vadd.f32 %v583, %v806
        %808 = vmatprep.mubr.bf16.mxu0 0
        %809 = vmatmul.mubr.bf16.gmra.mxu0 %v536
        %v810 = vpop.f32.mrf.mxu0
        %v811 = vadd.f32 %v579, %v810
        %v812 = vpop.f32.mrf.mxu0
        %v813 = vadd.f32 %v583, %v812
        %v814 = vpop.f32.mrf.mxu0
        %v815 = vadd.f32 %v579, %v814
        %v816 = vpop.f32.mrf.mxu0
        %v817 = vadd.f32 %v583, %v816
        %818 = vmatprep.mubr.bf16.mxu0 0
        %819 = vmatmul.mubr.bf16.gmra.mxu0 %v537
        %v820 = vpop.f32.mrf.mxu0
        %v821 = vadd.f32 %v579, %v820
        %v822 = vpop.f32.mrf.mxu0
        %v823 = vadd.f32 %v583, %v822
        %v824 = vpop.f32.mrf.mxu0
        %v825 = vadd.f32 %v579, %v824
        %v826 = vpop.f32.mrf.mxu0
        %v827 = vadd.f32 %v583, %v826
        %828 = vmatprep.mubr.bf16.mxu0 0
        %829 = vmatmul.mubr.bf16.gmra.mxu0 %v538
        %v830 = vpop.f32.mrf.mxu0
        %v831 = vadd.f32 %v579, %v830
        %v832 = vpop.f32.mrf.mxu0
        %v833 = vadd.f32 %v583, %v832
        %v834 = vpop.f32.mrf.mxu0
        %v835 = vadd.f32 %v579, %v834
        %v836 = vpop.f32.mrf.mxu0
        %v837 = vadd.f32 %v583, %v836
        %838 = vmatprep.mubr.bf16.mxu0 0
        %839 = vmatmul.mubr.bf16.gmra.mxu0 %v539
        %v840 = vpop.f32.mrf.mxu0
        %v841 = vadd.f32 %v579, %v840
        %v842 = vpop.f32.mrf.mxu0
        %v843 = vadd.f32 %v583, %v842
        %v844 = vpop.f32.mrf.mxu0
        %v845 = vadd.f32 %v579, %v844
        %v846 = vpop.f32.mrf.mxu0
        %v847 = vadd.f32 %v583, %v846
        %848 = vmatprep.mubr.bf16.mxu0 0
        %849 = vmatmul.mubr.bf16.gmra.mxu0 %v540
        %v850 = vpop.f32.mrf.mxu0
        %v851 = vadd.f32 %v579, %v850
        %v852 = vpop.f32.mrf.mxu0
        %v853 = vadd.f32 %v583, %v852
        %v854 = vpop.f32.mrf.mxu0
        %v855 = vadd.f32 %v579, %v854
        %v856 = vpop.f32.mrf.mxu0
        %v857 = vadd.f32 %v583, %v856
        %858 = vmatprep.mubr.bf16.mxu0 0
        %859 = vmatmul.mubr.bf16.gmra.mxu0 %v541
        %v860 = vpop.f32.mrf.mxu0
        %v861 = vadd.f32 %v579, %v860
        %v862 = vpop.f32.mrf.mxu0
        %v863 = vadd.f32 %v583, %v862
        %v864 = vpop.f32.mrf.mxu0
        %v865 = vadd.f32 %v579, %v864
        %v866 = vpop.f32.mrf.mxu0
        %v867 = vadd.f32 %v583, %v866
        %868 = vdwg.mxu0
        %869 = vmatprep.subr.bf16.mxu0 %v723
        %870 = vmatpush1.bf16.msra.mxu0 %v722
        %871 = vmatprep.subr.bf16.mxu0 %v719
        %872 = vmatpush1.bf16.msra.mxu0 %v718
        %873 = vmatprep.subr.bf16.mxu0 %v715
        %874 = vmatpush1.bf16.msra.mxu0 %v714
        %875 = vmatprep.subr.bf16.mxu0 %v711
        %876 = vmatpush1.bf16.msra.mxu0 %v710
        %877 = vmatprep.subr.bf16.mxu0 %v707
        %878 = vmatpush1.bf16.msra.mxu0 %v706
        %879 = vmatprep.subr.bf16.mxu0 %v703
        %880 = vmatpush1.bf16.msra.mxu0 %v702
        %881 = vmatprep.subr.bf16.mxu0 %v699
        %882 = vmatpush1.bf16.msra.mxu0 %v698
        %883 = vmatprep.subr.bf16.mxu0 %v695
        %884 = vmatpush1.bf16.msra.mxu0 %v694
        %885 = vmatprep.subr.bf16.mxu0 0
        %886 = vmatpush2.bf16.msra.mxu0 0
        %887 = vmatprep.subr.bf16.mxu0 0
        %888 = vmatpush2.bf16.msra.mxu0 0
        %889 = vmatprep.subr.bf16.mxu0 0
        %890 = vmatpush2.bf16.msra.mxu0 0
        %891 = vmatprep.subr.bf16.mxu0 0
        %892 = vmatpush2.bf16.msra.mxu0 0
        %893 = vmatprep.subr.bf16.mxu0 0
        %894 = vmatpush2.bf16.msra.mxu0 0
        %895 = vmatprep.subr.bf16.mxu0 0
        %896 = vmatpush2.bf16.msra.mxu0 0
        %897 = vmatprep.subr.bf16.mxu0 0
        %898 = vmatpush2.bf16.msra.mxu0 0
        %899 = vmatprep.subr.bf16.mxu0 0
        %900 = vmatpush2.bf16.msra.mxu0 0
        %901 = vmatprep.mubr.bf16.mxu0 0
        %902 = vmatmul.mubr.bf16.gmra.mxu0 %v534
        %v903 = vpop.f32.mrf.mxu0
        %v904 = vadd.f32 %v587, %v903
        %v905 = vpop.f32.mrf.mxu0
        %v906 = vadd.f32 %v591, %v905
        %v907 = vpop.f32.mrf.mxu0
        %v908 = vadd.f32 %v587, %v907
        %v909 = vpop.f32.mrf.mxu0
        %v910 = vadd.f32 %v591, %v909
        %911 = vmatprep.mubr.bf16.mxu0 0
        %912 = vmatmul.mubr.bf16.gmra.mxu0 %v535
        %v913 = vpop.f32.mrf.mxu0
        %v914 = vadd.f32 %v587, %v913
        %v915 = vpop.f32.mrf.mxu0
        %v916 = vadd.f32 %v591, %v915
        %v917 = vpop.f32.mrf.mxu0
        %v918 = vadd.f32 %v587, %v917
        %v919 = vpop.f32.mrf.mxu0
        %v920 = vadd.f32 %v591, %v919
        %921 = vmatprep.mubr.bf16.mxu0 0
        %922 = vmatmul.mubr.bf16.gmra.mxu0 %v536
        %v923 = vpop.f32.mrf.mxu0
        %v924 = vadd.f32 %v587, %v923
        %v925 = vpop.f32.mrf.mxu0
        %v926 = vadd.f32 %v591, %v925
        %v927 = vpop.f32.mrf.mxu0
        %v928 = vadd.f32 %v587, %v927
        %v929 = vpop.f32.mrf.mxu0
        %v930 = vadd.f32 %v591, %v929
        %931 = vmatprep.mubr.bf16.mxu0 0
        %932 = vmatmul.mubr.bf16.gmra.mxu0 %v537
        %v933 = vpop.f32.mrf.mxu0
        %v934 = vadd.f32 %v587, %v933
        %v935 = vpop.f32.mrf.mxu0
        %v936 = vadd.f32 %v591, %v935
        %v937 = vpop.f32.mrf.mxu0
        %v938 = vadd.f32 %v587, %v937
        %v939 = vpop.f32.mrf.mxu0
        %v940 = vadd.f32 %v591, %v939
        %941 = vmatprep.mubr.bf16.mxu0 0
        %942 = vmatmul.mubr.bf16.gmra.mxu0 %v538
        %v943 = vpop.f32.mrf.mxu0
        %v944 = vadd.f32 %v587, %v943
        %v945 = vpop.f32.mrf.mxu0
        %v946 = vadd.f32 %v591, %v945
        %v947 = vpop.f32.mrf.mxu0
        %v948 = vadd.f32 %v587, %v947
        %v949 = vpop.f32.mrf.mxu0
        %v950 = vadd.f32 %v591, %v949
        %951 = vmatprep.mubr.bf16.mxu0 0
        %952 = vmatmul.mubr.bf16.gmra.mxu0 %v539
        %v953 = vpop.f32.mrf.mxu0
        %v954 = vadd.f32 %v587, %v953
        %v955 = vpop.f32.mrf.mxu0
        %v956 = vadd.f32 %v591, %v955
        %v957 = vpop.f32.mrf.mxu0
        %v958 = vadd.f32 %v587, %v957
        %v959 = vpop.f32.mrf.mxu0
        %v960 = vadd.f32 %v591, %v959
        %961 = vmatprep.mubr.bf16.mxu0 0
        %962 = vmatmul.mubr.bf16.gmra.mxu0 %v540
        %v963 = vpop.f32.mrf.mxu0
        %v964 = vadd.f32 %v587, %v963
        %v965 = vpop.f32.mrf.mxu0
        %v966 = vadd.f32 %v591, %v965
        %v967 = vpop.f32.mrf.mxu0
        %v968 = vadd.f32 %v587, %v967
        %v969 = vpop.f32.mrf.mxu0
        %v970 = vadd.f32 %v591, %v969
        %971 = vmatprep.mubr.bf16.mxu0 0
        %972 = vmatmul.mubr.bf16.gmra.mxu0 %v541
        %v973 = vpop.f32.mrf.mxu0
        %v974 = vadd.f32 %v587, %v973
        %v975 = vpop.f32.mrf.mxu0
        %v976 = vadd.f32 %v591, %v975
        %v977 = vpop.f32.mrf.mxu0
        %v978 = vadd.f32 %v587, %v977
        %v979 = vpop.f32.mrf.mxu0
        %v980 = vadd.f32 %v591, %v979
        %981 = vdwg.mxu0
        %v982 = vld [vmem:[#allocation3] sm:$0xff]
        %v983 = vld [vmem:[#allocation3 + $0x8] sm:$0xff]
        %v984 = vld [vmem:[#allocation3 + $0x10] sm:$0xff]
        %v985 = vld [vmem:[#allocation3 + $0x18] sm:$0xff]
        %v986 = vld [vmem:[#allocation3 + $0x20] sm:$0xff]
        %v987 = vld [vmem:[#allocation3 + $0x28] sm:$0xff]
        %v988 = vld [vmem:[#allocation3 + $0x30] sm:$0xff]
        %v989 = vld [vmem:[#allocation3 + $0x38] sm:$0xff]
        %v990 = vld [vmem:[#allocation3 + $0x40] sm:$0xff]
        %v991 = vld [vmem:[#allocation3 + $0x48] sm:$0xff]
        %v992 = vld [vmem:[#allocation3 + $0x50] sm:$0xff]
        %v993 = vld [vmem:[#allocation3 + $0x58] sm:$0xff]
        %v994 = vld [vmem:[#allocation3 + $0x60] sm:$0xff]
        %v995 = vld [vmem:[#allocation3 + $0x68] sm:$0xff]
        %v996 = vld [vmem:[#allocation3 + $0x70] sm:$0xff]
        %v997 = vld [vmem:[#allocation3 + $0x78] sm:$0xff]
        %v998 = vld [vmem:[#allocation3 + $0x80] sm:$0xff]
        %v999 = vld [vmem:[#allocation3 + $0x88] sm:$0xff]
        %v1000 = vld [vmem:[#allocation3 + $0x90] sm:$0xff]
        %v1001 = vld [vmem:[#allocation3 + $0x98] sm:$0xff]
        %v1002 = vld [vmem:[#allocation3 + $0xa0] sm:$0xff]
        %v1003 = vld [vmem:[#allocation3 + $0xa8] sm:$0xff]
        %v1004 = vld [vmem:[#allocation3 + $0xb0] sm:$0xff]
        %v1005 = vld [vmem:[#allocation3 + $0xb8] sm:$0xff]
        %v1006 = vld [vmem:[#allocation3 + $0xc0] sm:$0xff]
        %v1007 = vld [vmem:[#allocation3 + $0xc8] sm:$0xff]
        %v1008 = vld [vmem:[#allocation3 + $0xd0] sm:$0xff]
        %v1009 = vld [vmem:[#allocation3 + $0xd8] sm:$0xff]
        %v1010 = vld [vmem:[#allocation3 + $0xe0] sm:$0xff]
        %v1011 = vld [vmem:[#allocation3 + $0xe8] sm:$0xff]
        %v1012 = vld [vmem:[#allocation3 + $0xf0] sm:$0xff]
        %v1013 = vld [vmem:[#allocation3 + $0xf8] sm:$0xff]
        %v1014 = vld [vmem:[#allocation3 + $0x100] sm:$0xff]
        %v1015 = vld [vmem:[#allocation3 + $0x108] sm:$0xff]
        %v1016 = vld [vmem:[#allocation3 + $0x110] sm:$0xff]
        %v1017 = vld [vmem:[#allocation3 + $0x118] sm:$0xff]
        %v1018 = vld [vmem:[#allocation3 + $0x120] sm:$0xff]
        %v1019 = vld [vmem:[#allocation3 + $0x128] sm:$0xff]
        %v1020 = vld [vmem:[#allocation3 + $0x130] sm:$0xff]
        %v1021 = vld [vmem:[#allocation3 + $0x138] sm:$0xff]
        %v1022 = vld [vmem:[#allocation3 + $0x140] sm:$0xff]
        %v1023 = vld [vmem:[#allocation3 + $0x148] sm:$0xff]
        %v1024 = vld [vmem:[#allocation3 + $0x150] sm:$0xff]
        %v1025 = vld [vmem:[#allocation3 + $0x158] sm:$0xff]
        %v1026 = vld [vmem:[#allocation3 + $0x160] sm:$0xff]
        %v1027 = vld [vmem:[#allocation3 + $0x168] sm:$0xff]
        %v1028 = vld [vmem:[#allocation3 + $0x170] sm:$0xff]
        %v1029 = vld [vmem:[#allocation3 + $0x178] sm:$0xff]
        %v1030 = vld [vmem:[#allocation3 + $0x180] sm:$0xff]
        %v1031 = vld [vmem:[#allocation3 + $0x188] sm:$0xff]
        %v1032 = vld [vmem:[#allocation3 + $0x190] sm:$0xff]
        %v1033 = vld [vmem:[#allocation3 + $0x198] sm:$0xff]
        %v1034 = vld [vmem:[#allocation3 + $0x1a0] sm:$0xff]
        %v1035 = vld [vmem:[#allocation3 + $0x1a8] sm:$0xff]
        %v1036 = vld [vmem:[#allocation3 + $0x1b0] sm:$0xff]
        %v1037 = vld [vmem:[#allocation3 + $0x1b8] sm:$0xff]
        %v1038 = vld [vmem:[#allocation3 + $0x1c0] sm:$0xff]
        %v1039 = vld [vmem:[#allocation3 + $0x1c8] sm:$0xff]
        %v1040 = vld [vmem:[#allocation3 + $0x1d0] sm:$0xff]
        %v1041 = vld [vmem:[#allocation3 + $0x1d8] sm:$0xff]
        %v1042 = vld [vmem:[#allocation3 + $0x1e0] sm:$0xff]
        %v1043 = vld [vmem:[#allocation3 + $0x1e8] sm:$0xff]
        %v1044 = vld [vmem:[#allocation3 + $0x1f0] sm:$0xff]
        %v1045 = vld [vmem:[#allocation3 + $0x1f8] sm:$0xff]
        %v1046 = vadd.f32 %v791, %v982
        %v1047 = vadd.f32 %v793, %v983
        %v1048 = vadd.f32 %v904, %v984
        %v1049 = vadd.f32 %v906, %v985
        %v1050 = vadd.f32 %v795, %v986
        %v1051 = vadd.f32 %v797, %v987
        %v1052 = vadd.f32 %v908, %v988
        %v1053 = vadd.f32 %v910, %v989
        %v1054 = vadd.f32 %v801, %v990
        %v1055 = vadd.f32 %v803, %v991
        %v1056 = vadd.f32 %v914, %v992
        %v1057 = vadd.f32 %v916, %v993
        %v1058 = vadd.f32 %v805, %v994
        %v1059 = vadd.f32 %v807, %v995
        %v1060 = vadd.f32 %v918, %v996
        %v1061 = vadd.f32 %v920, %v997
        %v1062 = vadd.f32 %v811, %v998
        %v1063 = vadd.f32 %v813, %v999
        %v1064 = vadd.f32 %v924, %v1000
        %v1065 = vadd.f32 %v926, %v1001
        %v1066 = vadd.f32 %v815, %v1002
        %v1067 = vadd.f32 %v817, %v1003
        %v1068 = vadd.f32 %v928, %v1004
        %v1069 = vadd.f32 %v930, %v1005
        %v1070 = vadd.f32 %v821, %v1006
        %v1071 = vadd.f32 %v823, %v1007
        %v1072 = vadd.f32 %v934, %v1008
        %v1073 = vadd.f32 %v936, %v1009
        %v1074 = vadd.f32 %v825, %v1010
        %v1075 = vadd.f32 %v827, %v1011
        %v1076 = vadd.f32 %v938, %v1012
        %v1077 = vadd.f32 %v940, %v1013
        %v1078 = vadd.f32 %v831, %v1014
        %v1079 = vadd.f32 %v833, %v1015
        %v1080 = vadd.f32 %v944, %v1016
        %v1081 = vadd.f32 %v946, %v1017
        %v1082 = vadd.f32 %v835, %v1018
        %v1083 = vadd.f32 %v837, %v1019
        %v1084 = vadd.f32 %v948, %v1020
        %v1085 = vadd.f32 %v950, %v1021
        %v1086 = vadd.f32 %v841, %v1022
        %v1087 = vadd.f32 %v843, %v1023
        %v1088 = vadd.f32 %v954, %v1024
        %v1089 = vadd.f32 %v956, %v1025
        %v1090 = vadd.f32 %v845, %v1026
        %v1091 = vadd.f32 %v847, %v1027
        %v1092 = vadd.f32 %v958, %v1028
        %v1093 = vadd.f32 %v960, %v1029
        %v1094 = vadd.f32 %v851, %v1030
        %v1095 = vadd.f32 %v853, %v1031
        %v1096 = vadd.f32 %v964, %v1032
        %v1097 = vadd.f32 %v966, %v1033
        %v1098 = vadd.f32 %v855, %v1034
        %v1099 = vadd.f32 %v857, %v1035
        %v1100 = vadd.f32 %v968, %v1036
        %v1101 = vadd.f32 %v970, %v1037
        %v1102 = vadd.f32 %v861, %v1038
        %v1103 = vadd.f32 %v863, %v1039
        %v1104 = vadd.f32 %v974, %v1040
        %v1105 = vadd.f32 %v976, %v1041
        %v1106 = vadd.f32 %v865, %v1042
        %v1107 = vadd.f32 %v867, %v1043
        %v1108 = vadd.f32 %v978, %v1044
        %v1109 = vadd.f32 %v980, %v1045
        %v1110 = vmul.f32 %v1046, 0.5
        %v1111 = vmul.f32 %v1047, 0.5
        %v1112 = vmul.f32 %v1048, 0.5
        %v1113 = vmul.f32 %v1049, 0.5
        %v1114 = vmul.f32 %v1050, 0.5
        %v1115 = vmul.f32 %v1051, 0.5
        %v1116 = vmul.f32 %v1052, 0.5
        %v1117 = vmul.f32 %v1053, 0.5
        %v1118 = vmul.f32 %v1054, 0.5
        %v1119 = vmul.f32 %v1055, 0.5
        %v1120 = vmul.f32 %v1056, 0.5
        %v1121 = vmul.f32 %v1057, 0.5
        %v1122 = vmul.f32 %v1058, 0.5
        %v1123 = vmul.f32 %v1059, 0.5
        %v1124 = vmul.f32 %v1060, 0.5
        %v1125 = vmul.f32 %v1061, 0.5
        %v1126 = vmul.f32 %v1062, 0.5
        %v1127 = vmul.f32 %v1063, 0.5
        %v1128 = vmul.f32 %v1064, 0.5
        %v1129 = vmul.f32 %v1065, 0.5
        %v1130 = vmul.f32 %v1066, 0.5
        %v1131 = vmul.f32 %v1067, 0.5
        %v1132 = vmul.f32 %v1068, 0.5
        %v1133 = vmul.f32 %v1069, 0.5
        %v1134 = vmul.f32 %v1070, 0.5
        %v1135 = vmul.f32 %v1071, 0.5
        %v1136 = vmul.f32 %v1072, 0.5
        %v1137 = vmul.f32 %v1073, 0.5
        %v1138 = vmul.f32 %v1074, 0.5
        %v1139 = vmul.f32 %v1075, 0.5
        %v1140 = vmul.f32 %v1076, 0.5
        %v1141 = vmul.f32 %v1077, 0.5
        %v1142 = vmul.f32 %v1078, 0.5
        %v1143 = vmul.f32 %v1079, 0.5
        %v1144 = vmul.f32 %v1080, 0.5
        %v1145 = vmul.f32 %v1081, 0.5
        %v1146 = vmul.f32 %v1082, 0.5
        %v1147 = vmul.f32 %v1083, 0.5
        %v1148 = vmul.f32 %v1084, 0.5
        %v1149 = vmul.f32 %v1085, 0.5
        %v1150 = vmul.f32 %v1086, 0.5
        %v1151 = vmul.f32 %v1087, 0.5
        %v1152 = vmul.f32 %v1088, 0.5
        %v1153 = vmul.f32 %v1089, 0.5
        %v1154 = vmul.f32 %v1090, 0.5
        %v1155 = vmul.f32 %v1091, 0.5
        %v1156 = vmul.f32 %v1092, 0.5
        %v1157 = vmul.f32 %v1093, 0.5
        %v1158 = vmul.f32 %v1094, 0.5
        %v1159 = vmul.f32 %v1095, 0.5
        %v1160 = vmul.f32 %v1096, 0.5
        %v1161 = vmul.f32 %v1097, 0.5
        %v1162 = vmul.f32 %v1098, 0.5
        %v1163 = vmul.f32 %v1099, 0.5
        %v1164 = vmul.f32 %v1100, 0.5
        %v1165 = vmul.f32 %v1101, 0.5
        %v1166 = vmul.f32 %v1102, 0.5
        %v1167 = vmul.f32 %v1103, 0.5
        %v1168 = vmul.f32 %v1104, 0.5
        %v1169 = vmul.f32 %v1105, 0.5
        %v1170 = vmul.f32 %v1106, 0.5
        %v1171 = vmul.f32 %v1107, 0.5
        %v1172 = vmul.f32 %v1108, 0.5
        %v1173 = vmul.f32 %v1109, 0.5
        %vm1174 = vcmp.ge.f32.partialorder %v1110, 1.0
        %vm1175 = vcmp.ge.f32.partialorder %v1111, 1.0
        %vm1176 = vcmp.ge.f32.partialorder %v1112, 1.0
        %vm1177 = vcmp.ge.f32.partialorder %v1113, 1.0
        %vm1178 = vcmp.ge.f32.partialorder %v1114, 1.0
        %vm1179 = vcmp.ge.f32.partialorder %v1115, 1.0
        %vm1180 = vcmp.ge.f32.partialorder %v1116, 1.0
        %vm1181 = vcmp.ge.f32.partialorder %v1117, 1.0
        %vm1182 = vcmp.ge.f32.partialorder %v1118, 1.0
        %vm1183 = vcmp.ge.f32.partialorder %v1119, 1.0
        %vm1184 = vcmp.ge.f32.partialorder %v1120, 1.0
        %vm1185 = vcmp.ge.f32.partialorder %v1121, 1.0
        %vm1186 = vcmp.ge.f32.partialorder %v1122, 1.0
        %vm1187 = vcmp.ge.f32.partialorder %v1123, 1.0
        %vm1188 = vcmp.ge.f32.partialorder %v1124, 1.0
        %vm1189 = vcmp.ge.f32.partialorder %v1125, 1.0
        %vm1190 = vcmp.ge.f32.partialorder %v1126, 1.0
        %vm1191 = vcmp.ge.f32.partialorder %v1127, 1.0
        %vm1192 = vcmp.ge.f32.partialorder %v1128, 1.0
        %vm1193 = vcmp.ge.f32.partialorder %v1129, 1.0
        %vm1194 = vcmp.ge.f32.partialorder %v1130, 1.0
        %vm1195 = vcmp.ge.f32.partialorder %v1131, 1.0
        %vm1196 = vcmp.ge.f32.partialorder %v1132, 1.0
        %vm1197 = vcmp.ge.f32.partialorder %v1133, 1.0
        %vm1198 = vcmp.ge.f32.partialorder %v1134, 1.0
        %vm1199 = vcmp.ge.f32.partialorder %v1135, 1.0
        %vm1200 = vcmp.ge.f32.partialorder %v1136, 1.0
        %vm1201 = vcmp.ge.f32.partialorder %v1137, 1.0
        %vm1202 = vcmp.ge.f32.partialorder %v1138, 1.0
        %vm1203 = vcmp.ge.f32.partialorder %v1139, 1.0
        %vm1204 = vcmp.ge.f32.partialorder %v1140, 1.0
        %vm1205 = vcmp.ge.f32.partialorder %v1141, 1.0
        %vm1206 = vcmp.ge.f32.partialorder %v1142, 1.0
        %vm1207 = vcmp.ge.f32.partialorder %v1143, 1.0
        %vm1208 = vcmp.ge.f32.partialorder %v1144, 1.0
        %vm1209 = vcmp.ge.f32.partialorder %v1145, 1.0
        %vm1210 = vcmp.ge.f32.partialorder %v1146, 1.0
        %vm1211 = vcmp.ge.f32.partialorder %v1147, 1.0
        %vm1212 = vcmp.ge.f32.partialorder %v1148, 1.0
        %vm1213 = vcmp.ge.f32.partialorder %v1149, 1.0
        %vm1214 = vcmp.ge.f32.partialorder %v1150, 1.0
        %vm1215 = vcmp.ge.f32.partialorder %v1151, 1.0
        %vm1216 = vcmp.ge.f32.partialorder %v1152, 1.0
        %vm1217 = vcmp.ge.f32.partialorder %v1153, 1.0
        %vm1218 = vcmp.ge.f32.partialorder %v1154, 1.0
        %vm1219 = vcmp.ge.f32.partialorder %v1155, 1.0
        %vm1220 = vcmp.ge.f32.partialorder %v1156, 1.0
        %vm1221 = vcmp.ge.f32.partialorder %v1157, 1.0
        %vm1222 = vcmp.ge.f32.partialorder %v1158, 1.0
        %vm1223 = vcmp.ge.f32.partialorder %v1159, 1.0
        %vm1224 = vcmp.ge.f32.partialorder %v1160, 1.0
        %vm1225 = vcmp.ge.f32.partialorder %v1161, 1.0
        %vm1226 = vcmp.ge.f32.partialorder %v1162, 1.0
        %vm1227 = vcmp.ge.f32.partialorder %v1163, 1.0
        %vm1228 = vcmp.ge.f32.partialorder %v1164, 1.0
        %vm1229 = vcmp.ge.f32.partialorder %v1165, 1.0
        %vm1230 = vcmp.ge.f32.partialorder %v1166, 1.0
        %vm1231 = vcmp.ge.f32.partialorder %v1167, 1.0
        %vm1232 = vcmp.ge.f32.partialorder %v1168, 1.0
        %vm1233 = vcmp.ge.f32.partialorder %v1169, 1.0
        %vm1234 = vcmp.ge.f32.partialorder %v1170, 1.0
        %vm1235 = vcmp.ge.f32.partialorder %v1171, 1.0
        %vm1236 = vcmp.ge.f32.partialorder %v1172, 1.0
        %vm1237 = vcmp.ge.f32.partialorder %v1173, 1.0
        %v1238 = vsel %vm1174, 0.0, %v1110
        %v1239 = vsel %vm1175, 0.0, %v1111
        %v1240 = vsel %vm1176, 0.0, %v1112
        %v1241 = vsel %vm1177, 0.0, %v1113
        %v1242 = vsel %vm1178, 0.0, %v1114
        %v1243 = vsel %vm1179, 0.0, %v1115
        %v1244 = vsel %vm1180, 0.0, %v1116
        %v1245 = vsel %vm1181, 0.0, %v1117
        %v1246 = vsel %vm1182, 0.0, %v1118
        %v1247 = vsel %vm1183, 0.0, %v1119
        %v1248 = vsel %vm1184, 0.0, %v1120
        %v1249 = vsel %vm1185, 0.0, %v1121
        %v1250 = vsel %vm1186, 0.0, %v1122
        %v1251 = vsel %vm1187, 0.0, %v1123
        %v1252 = vsel %vm1188, 0.0, %v1124
        %v1253 = vsel %vm1189, 0.0, %v1125
        %v1254 = vsel %vm1190, 0.0, %v1126
        %v1255 = vsel %vm1191, 0.0, %v1127
        %v1256 = vsel %vm1192, 0.0, %v1128
        %v1257 = vsel %vm1193, 0.0, %v1129
        %v1258 = vsel %vm1194, 0.0, %v1130
        %v1259 = vsel %vm1195, 0.0, %v1131
        %v1260 = vsel %vm1196, 0.0, %v1132
        %v1261 = vsel %vm1197, 0.0, %v1133
        %v1262 = vsel %vm1198, 0.0, %v1134
        %v1263 = vsel %vm1199, 0.0, %v1135
        %v1264 = vsel %vm1200, 0.0, %v1136
        %v1265 = vsel %vm1201, 0.0, %v1137
        %v1266 = vsel %vm1202, 0.0, %v1138
        %v1267 = vsel %vm1203, 0.0, %v1139
        %v1268 = vsel %vm1204, 0.0, %v1140
        %v1269 = vsel %vm1205, 0.0, %v1141
        %v1270 = vsel %vm1206, 0.0, %v1142
        %v1271 = vsel %vm1207, 0.0, %v1143
        %v1272 = vsel %vm1208, 0.0, %v1144
        %v1273 = vsel %vm1209, 0.0, %v1145
        %v1274 = vsel %vm1210, 0.0, %v1146
        %v1275 = vsel %vm1211, 0.0, %v1147
        %v1276 = vsel %vm1212, 0.0, %v1148
        %v1277 = vsel %vm1213, 0.0, %v1149
        %v1278 = vsel %vm1214, 0.0, %v1150
        %v1279 = vsel %vm1215, 0.0, %v1151
        %v1280 = vsel %vm1216, 0.0, %v1152
        %v1281 = vsel %vm1217, 0.0, %v1153
        %v1282 = vsel %vm1218, 0.0, %v1154
        %v1283 = vsel %vm1219, 0.0, %v1155
        %v1284 = vsel %vm1220, 0.0, %v1156
        %v1285 = vsel %vm1221, 0.0, %v1157
        %v1286 = vsel %vm1222, 0.0, %v1158
        %v1287 = vsel %vm1223, 0.0, %v1159
        %v1288 = vsel %vm1224, 0.0, %v1160
        %v1289 = vsel %vm1225, 0.0, %v1161
        %v1290 = vsel %vm1226, 0.0, %v1162
        %v1291 = vsel %vm1227, 0.0, %v1163
        %v1292 = vsel %vm1228, 0.0, %v1164
        %v1293 = vsel %vm1229, 0.0, %v1165
        %v1294 = vsel %vm1230, 0.0, %v1166
        %v1295 = vsel %vm1231, 0.0, %v1167
        %v1296 = vsel %vm1232, 0.0, %v1168
        %v1297 = vsel %vm1233, 0.0, %v1169
        %v1298 = vsel %vm1234, 0.0, %v1170
        %v1299 = vsel %vm1235, 0.0, %v1171
        %v1300 = vsel %vm1236, 0.0, %v1172
        %v1301 = vsel %vm1237, 0.0, %v1173
        %1302 = vst [vmem:[#allocation3] sm:$0xff] %v1238
        %1303 = vst [vmem:[#allocation3 + $0x8] sm:$0xff] %v1239
        %1304 = vst [vmem:[#allocation3 + $0x10] sm:$0xff] %v1240
        %1305 = vst [vmem:[#allocation3 + $0x18] sm:$0xff] %v1241
        %1306 = vst [vmem:[#allocation3 + $0x20] sm:$0xff] %v1242
        %1307 = vst [vmem:[#allocation3 + $0x28] sm:$0xff] %v1243
        %1308 = vst [vmem:[#allocation3 + $0x30] sm:$0xff] %v1244
        %1309 = vst [vmem:[#allocation3 + $0x38] sm:$0xff] %v1245
        %1310 = vst [vmem:[#allocation3 + $0x40] sm:$0xff] %v1246
        %1311 = vst [vmem:[#allocation3 + $0x48] sm:$0xff] %v1247
        %1312 = vst [vmem:[#allocation3 + $0x50] sm:$0xff] %v1248
        %1313 = vst [vmem:[#allocation3 + $0x58] sm:$0xff] %v1249
        %1314 = vst [vmem:[#allocation3 + $0x60] sm:$0xff] %v1250
        %1315 = vst [vmem:[#allocation3 + $0x68] sm:$0xff] %v1251
        %1316 = vst [vmem:[#allocation3 + $0x70] sm:$0xff] %v1252
        %1317 = vst [vmem:[#allocation3 + $0x78] sm:$0xff] %v1253
        %1318 = vst [vmem:[#allocation3 + $0x80] sm:$0xff] %v1254
        %1319 = vst [vmem:[#allocation3 + $0x88] sm:$0xff] %v1255
        %1320 = vst [vmem:[#allocation3 + $0x90] sm:$0xff] %v1256
        %1321 = vst [vmem:[#allocation3 + $0x98] sm:$0xff] %v1257
        %1322 = vst [vmem:[#allocation3 + $0xa0] sm:$0xff] %v1258
        %1323 = vst [vmem:[#allocation3 + $0xa8] sm:$0xff] %v1259
        %1324 = vst [vmem:[#allocation3 + $0xb0] sm:$0xff] %v1260
        %1325 = vst [vmem:[#allocation3 + $0xb8] sm:$0xff] %v1261
        %1326 = vst [vmem:[#allocation3 + $0xc0] sm:$0xff] %v1262
        %1327 = vst [vmem:[#allocation3 + $0xc8] sm:$0xff] %v1263
        %1328 = vst [vmem:[#allocation3 + $0xd0] sm:$0xff] %v1264
        %1329 = vst [vmem:[#allocation3 + $0xd8] sm:$0xff] %v1265
        %1330 = vst [vmem:[#allocation3 + $0xe0] sm:$0xff] %v1266
        %1331 = vst [vmem:[#allocation3 + $0xe8] sm:$0xff] %v1267
        %1332 = vst [vmem:[#allocation3 + $0xf0] sm:$0xff] %v1268
        %1333 = vst [vmem:[#allocation3 + $0xf8] sm:$0xff] %v1269
        %1334 = vst [vmem:[#allocation3 + $0x100] sm:$0xff] %v1270
        %1335 = vst [vmem:[#allocation3 + $0x108] sm:$0xff] %v1271
        %1336 = vst [vmem:[#allocation3 + $0x110] sm:$0xff] %v1272
        %1337 = vst [vmem:[#allocation3 + $0x118] sm:$0xff] %v1273
        %1338 = vst [vmem:[#allocation3 + $0x120] sm:$0xff] %v1274
        %1339 = vst [vmem:[#allocation3 + $0x128] sm:$0xff] %v1275
        %1340 = vst [vmem:[#allocation3 + $0x130] sm:$0xff] %v1276
        %1341 = vst [vmem:[#allocation3 + $0x138] sm:$0xff] %v1277
        %1342 = vst [vmem:[#allocation3 + $0x140] sm:$0xff] %v1278
        %1343 = vst [vmem:[#allocation3 + $0x148] sm:$0xff] %v1279
        %1344 = vst [vmem:[#allocation3 + $0x150] sm:$0xff] %v1280
        %1345 = vst [vmem:[#allocation3 + $0x158] sm:$0xff] %v1281
        %1346 = vst [vmem:[#allocation3 + $0x160] sm:$0xff] %v1282
        %1347 = vst [vmem:[#allocation3 + $0x168] sm:$0xff] %v1283
        %1348 = vst [vmem:[#allocation3 + $0x170] sm:$0xff] %v1284
        %1349 = vst [vmem:[#allocation3 + $0x178] sm:$0xff] %v1285
        %1350 = vst [vmem:[#allocation3 + $0x180] sm:$0xff] %v1286
        %1351 = vst [vmem:[#allocation3 + $0x188] sm:$0xff] %v1287
        %1352 = vst [vmem:[#allocation3 + $0x190] sm:$0xff] %v1288
        %1353 = vst [vmem:[#allocation3 + $0x198] sm:$0xff] %v1289
        %1354 = vst [vmem:[#allocation3 + $0x1a0] sm:$0xff] %v1290
        %1355 = vst [vmem:[#allocation3 + $0x1a8] sm:$0xff] %v1291
        %1356 = vst [vmem:[#allocation3 + $0x1b0] sm:$0xff] %v1292
        %1357 = vst [vmem:[#allocation3 + $0x1b8] sm:$0xff] %v1293
        %1358 = vst [vmem:[#allocation3 + $0x1c0] sm:$0xff] %v1294
        %1359 = vst [vmem:[#allocation3 + $0x1c8] sm:$0xff] %v1295
        %1360 = vst [vmem:[#allocation3 + $0x1d0] sm:$0xff] %v1296
        %1361 = vst [vmem:[#allocation3 + $0x1d8] sm:$0xff] %v1297
        %1362 = vst [vmem:[#allocation3 + $0x1e0] sm:$0xff] %v1298
        %1363 = vst [vmem:[#allocation3 + $0x1e8] sm:$0xff] %v1299
        %1364 = vst [vmem:[#allocation3 + $0x1f0] sm:$0xff] %v1300
        %1365 = vst [vmem:[#allocation3 + $0x1f8] sm:$0xff] %v1301
        %v1366 = vsel %vm1174, 1, 0
        %v1367 = vsel %vm1175, 1, 0
        %v1368 = vsel %vm1176, 1, 0
        %v1369 = vsel %vm1177, 1, 0
        %v1370 = vsel %vm1178, 1, 0
        %v1371 = vsel %vm1179, 1, 0
        %v1372 = vsel %vm1180, 1, 0
        %v1373 = vsel %vm1181, 1, 0
        %v1374 = vsel %vm1182, 1, 0
        %v1375 = vsel %vm1183, 1, 0
        %v1376 = vsel %vm1184, 1, 0
        %v1377 = vsel %vm1185, 1, 0
        %v1378 = vsel %vm1186, 1, 0
        %v1379 = vsel %vm1187, 1, 0
        %v1380 = vsel %vm1188, 1, 0
        %v1381 = vsel %vm1189, 1, 0
        %v1382 = vsel %vm1190, 1, 0
        %v1383 = vsel %vm1191, 1, 0
        %v1384 = vsel %vm1192, 1, 0
        %v1385 = vsel %vm1193, 1, 0
        %v1386 = vsel %vm1194, 1, 0
        %v1387 = vsel %vm1195, 1, 0
        %v1388 = vsel %vm1196, 1, 0
        %v1389 = vsel %vm1197, 1, 0
        %v1390 = vsel %vm1198, 1, 0
        %v1391 = vsel %vm1199, 1, 0
        %v1392 = vsel %vm1200, 1, 0
        %v1393 = vsel %vm1201, 1, 0
        %v1394 = vsel %vm1202, 1, 0
        %v1395 = vsel %vm1203, 1, 0
        %v1396 = vsel %vm1204, 1, 0
        %v1397 = vsel %vm1205, 1, 0
        %v1398 = vsel %vm1206, 1, 0
        %v1399 = vsel %vm1207, 1, 0
        %v1400 = vsel %vm1208, 1, 0
        %v1401 = vsel %vm1209, 1, 0
        %v1402 = vsel %vm1210, 1, 0
        %v1403 = vsel %vm1211, 1, 0
        %v1404 = vsel %vm1212, 1, 0
        %v1405 = vsel %vm1213, 1, 0
        %v1406 = vsel %vm1214, 1, 0
        %v1407 = vsel %vm1215, 1, 0
        %v1408 = vsel %vm1216, 1, 0
        %v1409 = vsel %vm1217, 1, 0
        %v1410 = vsel %vm1218, 1, 0
        %v1411 = vsel %vm1219, 1, 0
        %v1412 = vsel %vm1220, 1, 0
        %v1413 = vsel %vm1221, 1, 0
        %v1414 = vsel %vm1222, 1, 0
        %v1415 = vsel %vm1223, 1, 0
        %v1416 = vsel %vm1224, 1, 0
        %v1417 = vsel %vm1225, 1, 0
        %v1418 = vsel %vm1226, 1, 0
        %v1419 = vsel %vm1227, 1, 0
        %v1420 = vsel %vm1228, 1, 0
        %v1421 = vsel %vm1229, 1, 0
        %v1422 = vsel %vm1230, 1, 0
        %v1423 = vsel %vm1231, 1, 0
        %v1424 = vsel %vm1232, 1, 0
        %v1425 = vsel %vm1233, 1, 0
        %v1426 = vsel %vm1234, 1, 0
        %v1427 = vsel %vm1235, 1, 0
        %v1428 = vsel %vm1236, 1, 0
        %v1429 = vsel %vm1237, 1, 0
        %v1430 = vcvt.s32.f32 %v1366
        %v1431 = vcvt.s32.f32 %v1367
        %v1432 = vcvt.s32.f32 %v1368
        %v1433 = vcvt.s32.f32 %v1369
        %v1434 = vcvt.s32.f32 %v1370
        %v1435 = vcvt.s32.f32 %v1371
        %v1436 = vcvt.s32.f32 %v1372
        %v1437 = vcvt.s32.f32 %v1373
        %v1438 = vcvt.s32.f32 %v1374
        %v1439 = vcvt.s32.f32 %v1375
        %v1440 = vcvt.s32.f32 %v1376
        %v1441 = vcvt.s32.f32 %v1377
        %v1442 = vcvt.s32.f32 %v1378
        %v1443 = vcvt.s32.f32 %v1379
        %v1444 = vcvt.s32.f32 %v1380
        %v1445 = vcvt.s32.f32 %v1381
        %v1446 = vcvt.s32.f32 %v1382
        %v1447 = vcvt.s32.f32 %v1383
        %v1448 = vcvt.s32.f32 %v1384
        %v1449 = vcvt.s32.f32 %v1385
        %v1450 = vcvt.s32.f32 %v1386
        %v1451 = vcvt.s32.f32 %v1387
        %v1452 = vcvt.s32.f32 %v1388
        %v1453 = vcvt.s32.f32 %v1389
        %v1454 = vcvt.s32.f32 %v1390
        %v1455 = vcvt.s32.f32 %v1391
        %v1456 = vcvt.s32.f32 %v1392
        %v1457 = vcvt.s32.f32 %v1393
        %v1458 = vcvt.s32.f32 %v1394
        %v1459 = vcvt.s32.f32 %v1395
        %v1460 = vcvt.s32.f32 %v1396
        %v1461 = vcvt.s32.f32 %v1397
        %v1462 = vcvt.s32.f32 %v1398
        %v1463 = vcvt.s32.f32 %v1399
        %v1464 = vcvt.s32.f32 %v1400
        %v1465 = vcvt.s32.f32 %v1401
        %v1466 = vcvt.s32.f32 %v1402
        %v1467 = vcvt.s32.f32 %v1403
        %v1468 = vcvt.s32.f32 %v1404
        %v1469 = vcvt.s32.f32 %v1405
        %v1470 = vcvt.s32.f32 %v1406
        %v1471 = vcvt.s32.f32 %v1407
        %v1472 = vcvt.s32.f32 %v1408
        %v1473 = vcvt.s32.f32 %v1409
        %v1474 = vcvt.s32.f32 %v1410
        %v1475 = vcvt.s32.f32 %v1411
        %v1476 = vcvt.s32.f32 %v1412
        %v1477 = vcvt.s32.f32 %v1413
        %v1478 = vcvt.s32.f32 %v1414
        %v1479 = vcvt.s32.f32 %v1415
        %v1480 = vcvt.s32.f32 %v1416
        %v1481 = vcvt.s32.f32 %v1417
        %v1482 = vcvt.s32.f32 %v1418
        %v1483 = vcvt.s32.f32 %v1419
        %v1484 = vcvt.s32.f32 %v1420
        %v1485 = vcvt.s32.f32 %v1421
        %v1486 = vcvt.s32.f32 %v1422
        %v1487 = vcvt.s32.f32 %v1423
        %v1488 = vcvt.s32.f32 %v1424
        %v1489 = vcvt.s32.f32 %v1425
        %v1490 = vcvt.s32.f32 %v1426
        %v1491 = vcvt.s32.f32 %v1427
        %v1492 = vcvt.s32.f32 %v1428
        %v1493 = vcvt.s32.f32 %v1429
        %v1494 = vpack.c.bf16 %v1434, %v1430
        %v1495 = vpack.c.bf16 %v1435, %v1431
        %v1496 = vpack.c.bf16 %v1436, %v1432
        %v1497 = vpack.c.bf16 %v1437, %v1433
        %v1498 = vpack.c.bf16 %v1442, %v1438
        %v1499 = vpack.c.bf16 %v1443, %v1439
        %v1500 = vpack.c.bf16 %v1444, %v1440
        %v1501 = vpack.c.bf16 %v1445, %v1441
        %v1502 = vpack.c.bf16 %v1450, %v1446
        %v1503 = vpack.c.bf16 %v1451, %v1447
        %v1504 = vpack.c.bf16 %v1452, %v1448
        %v1505 = vpack.c.bf16 %v1453, %v1449
        %v1506 = vpack.c.bf16 %v1458, %v1454
        %v1507 = vpack.c.bf16 %v1459, %v1455
        %v1508 = vpack.c.bf16 %v1460, %v1456
        %v1509 = vpack.c.bf16 %v1461, %v1457
        %v1510 = vpack.c.bf16 %v1466, %v1462
        %v1511 = vpack.c.bf16 %v1467, %v1463
        %v1512 = vpack.c.bf16 %v1468, %v1464
        %v1513 = vpack.c.bf16 %v1469, %v1465
        %v1514 = vpack.c.bf16 %v1474, %v1470
        %v1515 = vpack.c.bf16 %v1475, %v1471
        %v1516 = vpack.c.bf16 %v1476, %v1472
        %v1517 = vpack.c.bf16 %v1477, %v1473
        %v1518 = vpack.c.bf16 %v1482, %v1478
        %v1519 = vpack.c.bf16 %v1483, %v1479
        %v1520 = vpack.c.bf16 %v1484, %v1480
        %v1521 = vpack.c.bf16 %v1485, %v1481
        %v1522 = vpack.c.bf16 %v1490, %v1486
        %v1523 = vpack.c.bf16 %v1491, %v1487
        %v1524 = vpack.c.bf16 %v1492, %v1488
        %v1525 = vpack.c.bf16 %v1493, %v1489
        %v1526 = vld [vmem:[#allocation10] sm:$0xf]
        %v1527 = vld [vmem:[#allocation10 + $0x4] sm:$0xf]
        %v1528 = vld [vmem:[#allocation10 + $0x8] sm:$0xf]
        %v1529 = vld [vmem:[#allocation10 + $0xc] sm:$0xf]
        %v1530 = vld [vmem:[#allocation10 + $0x10] sm:$0xf]
        %v1531 = vld [vmem:[#allocation10 + $0x14] sm:$0xf]
        %v1532 = vld [vmem:[#allocation10 + $0x18] sm:$0xf]
        %v1533 = vld [vmem:[#allocation10 + $0x1c] sm:$0xf]
        %v1534 = vld [vmem:[#allocation10 + $0x20] sm:$0xf]
        %v1535 = vld [vmem:[#allocation10 + $0x24] sm:$0xf]
        %v1536 = vld [vmem:[#allocation10 + $0x28] sm:$0xf]
        %v1537 = vld [vmem:[#allocation10 + $0x2c] sm:$0xf]
        %v1538 = vld [vmem:[#allocation10 + $0x30] sm:$0xf]
        %v1539 = vld [vmem:[#allocation10 + $0x34] sm:$0xf]
        %v1540 = vld [vmem:[#allocation10 + $0x38] sm:$0xf]
        %v1541 = vld [vmem:[#allocation10 + $0x3c] sm:$0xf]
        %v1542 = vld [vmem:[#allocation10 + $0x40] sm:$0xf]
        %v1543 = vld [vmem:[#allocation10 + $0x44] sm:$0xf]
        %v1544 = vld [vmem:[#allocation10 + $0x48] sm:$0xf]
        %v1545 = vld [vmem:[#allocation10 + $0x4c] sm:$0xf]
        %v1546 = vld [vmem:[#allocation10 + $0x50] sm:$0xf]
        %v1547 = vld [vmem:[#allocation10 + $0x54] sm:$0xf]
        %v1548 = vld [vmem:[#allocation10 + $0x58] sm:$0xf]
        %v1549 = vld [vmem:[#allocation10 + $0x5c] sm:$0xf]
        %v1550 = vld [vmem:[#allocation10 + $0x60] sm:$0xf]
        %v1551 = vld [vmem:[#allocation10 + $0x64] sm:$0xf]
        %v1552 = vld [vmem:[#allocation10 + $0x68] sm:$0xf]
        %v1553 = vld [vmem:[#allocation10 + $0x6c] sm:$0xf]
        %v1554 = vld [vmem:[#allocation10 + $0x70] sm:$0xf]
        %v1555 = vld [vmem:[#allocation10 + $0x74] sm:$0xf]
        %v1556 = vld [vmem:[#allocation10 + $0x78] sm:$0xf]
        %v1557 = vld [vmem:[#allocation10 + $0x7c] sm:$0xf]
        %v1558 = vld [vmem:[#allocation10 + $0x80] sm:$0xf]
        %v1559 = vld [vmem:[#allocation10 + $0x84] sm:$0xf]
        %v1560 = vld [vmem:[#allocation10 + $0x88] sm:$0xf]
        %v1561 = vld [vmem:[#allocation10 + $0x8c] sm:$0xf]
        %v1562 = vld [vmem:[#allocation10 + $0x90] sm:$0xf]
        %v1563 = vld [vmem:[#allocation10 + $0x94] sm:$0xf]
        %v1564 = vld [vmem:[#allocation10 + $0x98] sm:$0xf]
        %v1565 = vld [vmem:[#allocation10 + $0x9c] sm:$0xf]
        %v1566 = vld [vmem:[#allocation10 + $0xa0] sm:$0xf]
        %v1567 = vld [vmem:[#allocation10 + $0xa4] sm:$0xf]
        %v1568 = vld [vmem:[#allocation10 + $0xa8] sm:$0xf]
        %v1569 = vld [vmem:[#allocation10 + $0xac] sm:$0xf]
        %v1570 = vld [vmem:[#allocation10 + $0xb0] sm:$0xf]
        %v1571 = vld [vmem:[#allocation10 + $0xb4] sm:$0xf]
        %v1572 = vld [vmem:[#allocation10 + $0xb8] sm:$0xf]
        %v1573 = vld [vmem:[#allocation10 + $0xbc] sm:$0xf]
        %v1574 = vld [vmem:[#allocation10 + $0xc0] sm:$0xf]
        %v1575 = vld [vmem:[#allocation10 + $0xc4] sm:$0xf]
        %v1576 = vld [vmem:[#allocation10 + $0xc8] sm:$0xf]
        %v1577 = vld [vmem:[#allocation10 + $0xcc] sm:$0xf]
        %v1578 = vld [vmem:[#allocation10 + $0xd0] sm:$0xf]
        %v1579 = vld [vmem:[#allocation10 + $0xd4] sm:$0xf]
        %v1580 = vld [vmem:[#allocation10 + $0xd8] sm:$0xf]
        %v1581 = vld [vmem:[#allocation10 + $0xdc] sm:$0xf]
        %v1582 = vld [vmem:[#allocation10 + $0xe0] sm:$0xf]
        %v1583 = vld [vmem:[#allocation10 + $0xe4] sm:$0xf]
        %v1584 = vld [vmem:[#allocation10 + $0xe8] sm:$0xf]
        %v1585 = vld [vmem:[#allocation10 + $0xec] sm:$0xf]
        %v1586 = vld [vmem:[#allocation10 + $0xf0] sm:$0xf]
        %v1587 = vld [vmem:[#allocation10 + $0xf4] sm:$0xf]
        %v1588 = vld [vmem:[#allocation10 + $0xf8] sm:$0xf]
        %v1589 = vld [vmem:[#allocation10 + $0xfc] sm:$0xf]
        %v1590 = vld [vmem:[%s4] sm:$0x1]
        %v1592 = vlaneseq
        %v1593 = vshrl.u32 %v1592, 7
        %v1594 = vsub.s32 0, %v1593
        %v1595 = vrot.slane %v1590, %v1594
        %v1661 = vunpack.c.l.b16 %v1526
        %v1662 = vunpack.c.l.b16 %v1527
        %v1663 = vunpack.c.l.b16 %v1528
        %v1664 = vunpack.c.l.b16 %v1529
        %v1665 = vunpack.c.l.b16 %v1530
        %v1666 = vunpack.c.l.b16 %v1531
        %v1667 = vunpack.c.l.b16 %v1532
        %v1668 = vunpack.c.l.b16 %v1533
        %v1669 = vunpack.c.l.b16 %v1534
        %v1670 = vunpack.c.l.b16 %v1535
        %v1671 = vunpack.c.l.b16 %v1536
        %v1672 = vunpack.c.l.b16 %v1537
        %v1673 = vunpack.c.l.b16 %v1538
        %v1674 = vunpack.c.l.b16 %v1539
        %v1675 = vunpack.c.l.b16 %v1540
        %v1676 = vunpack.c.l.b16 %v1541
        %v1677 = vunpack.c.l.b16 %v1542
        %v1678 = vunpack.c.l.b16 %v1543
        %v1679 = vunpack.c.l.b16 %v1544
        %v1680 = vunpack.c.l.b16 %v1545
        %v1681 = vunpack.c.l.b16 %v1546
        %v1682 = vunpack.c.l.b16 %v1547
        %v1683 = vunpack.c.l.b16 %v1548
        %v1684 = vunpack.c.l.b16 %v1549
        %v1685 = vunpack.c.l.b16 %v1550
        %v1686 = vunpack.c.l.b16 %v1551
        %v1687 = vunpack.c.l.b16 %v1552
        %v1688 = vunpack.c.l.b16 %v1553
        %v1689 = vunpack.c.l.b16 %v1554
        %v1690 = vunpack.c.l.b16 %v1555
        %v1691 = vunpack.c.l.b16 %v1556
        %v1692 = vunpack.c.l.b16 %v1557
        %v1693 = vunpack.c.l.b16 %v1558
        %v1694 = vunpack.c.l.b16 %v1559
        %v1695 = vunpack.c.l.b16 %v1560
        %v1696 = vunpack.c.l.b16 %v1561
        %v1697 = vunpack.c.l.b16 %v1562
        %v1698 = vunpack.c.l.b16 %v1563
        %v1699 = vunpack.c.l.b16 %v1564
        %v1700 = vunpack.c.l.b16 %v1565
        %v1701 = vunpack.c.l.b16 %v1566
        %v1702 = vunpack.c.l.b16 %v1567
        %v1703 = vunpack.c.l.b16 %v1568
        %v1704 = vunpack.c.l.b16 %v1569
        %v1705 = vunpack.c.l.b16 %v1570
        %v1706 = vunpack.c.l.b16 %v1571
        %v1707 = vunpack.c.l.b16 %v1572
        %v1708 = vunpack.c.l.b16 %v1573
        %v1709 = vunpack.c.l.b16 %v1574
        %v1710 = vunpack.c.l.b16 %v1575
        %v1711 = vunpack.c.l.b16 %v1576
        %v1712 = vunpack.c.l.b16 %v1577
        %v1713 = vunpack.c.l.b16 %v1578
        %v1714 = vunpack.c.l.b16 %v1579
        %v1715 = vunpack.c.l.b16 %v1580
        %v1716 = vunpack.c.l.b16 %v1581
        %v1717 = vunpack.c.l.b16 %v1582
        %v1718 = vunpack.c.l.b16 %v1583
        %v1719 = vunpack.c.l.b16 %v1584
        %v1720 = vunpack.c.l.b16 %v1585
        %v1721 = vunpack.c.l.b16 %v1586
        %v1722 = vunpack.c.l.b16 %v1587
        %v1723 = vunpack.c.l.b16 %v1588
        %v1724 = vunpack.c.l.b16 %v1589
        %v1725 = vpack.c.b16 %v1662, %v1661
        %v1726 = vpack.c.b16 %v1664, %v1663
        %v1727 = vpack.c.b16 %v1666, %v1665
        %v1728 = vpack.c.b16 %v1668, %v1667
        %v1729 = vpack.c.b16 %v1670, %v1669
        %v1730 = vpack.c.b16 %v1672, %v1671
        %v1731 = vpack.c.b16 %v1674, %v1673
        %v1732 = vpack.c.b16 %v1676, %v1675
        %v1733 = vpack.c.b16 %v1678, %v1677
        %v1734 = vpack.c.b16 %v1680, %v1679
        %v1735 = vpack.c.b16 %v1682, %v1681
        %v1736 = vpack.c.b16 %v1684, %v1683
        %v1737 = vpack.c.b16 %v1686, %v1685
        %v1738 = vpack.c.b16 %v1688, %v1687
        %v1739 = vpack.c.b16 %v1690, %v1689
        %v1740 = vpack.c.b16 %v1692, %v1691
        %v1741 = vpack.c.b16 %v1694, %v1693
        %v1742 = vpack.c.b16 %v1696, %v1695
        %v1743 = vpack.c.b16 %v1698, %v1697
        %v1744 = vpack.c.b16 %v1700, %v1699
        %v1745 = vpack.c.b16 %v1702, %v1701
        %v1746 = vpack.c.b16 %v1704, %v1703
        %v1747 = vpack.c.b16 %v1706, %v1705
        %v1748 = vpack.c.b16 %v1708, %v1707
        %v1749 = vpack.c.b16 %v1710, %v1709
        %v1750 = vpack.c.b16 %v1712, %v1711
        %v1751 = vpack.c.b16 %v1714, %v1713
        %v1752 = vpack.c.b16 %v1716, %v1715
        %v1753 = vpack.c.b16 %v1718, %v1717
        %v1754 = vpack.c.b16 %v1720, %v1719
        %v1755 = vpack.c.b16 %v1722, %v1721
        %v1756 = vpack.c.b16 %v1724, %v1723
        %1789 = vmatprep.subr.bf16.mxu0 0
        %1790 = vmatpush1.bf16.msra.mxu0 %v1732
        %1791 = vmatprep.subr.bf16.mxu0 0
        %1792 = vmatpush1.bf16.msra.mxu0 %v1731
        %1793 = vmatprep.subr.bf16.mxu0 0
        %1794 = vmatpush1.bf16.msra.mxu0 %v1730
        %1795 = vmatprep.subr.bf16.mxu0 0
        %1796 = vmatpush1.bf16.msra.mxu0 %v1729
        %1797 = vmatprep.subr.bf16.mxu0 0
        %1798 = vmatpush1.bf16.msra.mxu0 %v1728
        %1799 = vmatprep.subr.bf16.mxu0 0
        %1800 = vmatpush1.bf16.msra.mxu0 %v1727
        %1801 = vmatprep.subr.bf16.mxu0 0
        %1802 = vmatpush1.bf16.msra.mxu0 %v1726
        %1803 = vmatprep.subr.bf16.mxu0 0
        %1804 = vmatpush1.bf16.msra.mxu0 %v1725
        %1805 = vmatprep.subr.bf16.mxu0 0
        %1806 = vmatpush2.bf16.msra.mxu0 %v1740
        %1807 = vmatprep.subr.bf16.mxu0 0
        %1808 = vmatpush2.bf16.msra.mxu0 %v1739
        %1809 = vmatprep.subr.bf16.mxu0 0
        %1810 = vmatpush2.bf16.msra.mxu0 %v1738
        %1811 = vmatprep.subr.bf16.mxu0 0
        %1812 = vmatpush2.bf16.msra.mxu0 %v1737
        %1813 = vmatprep.subr.bf16.mxu0 0
        %1814 = vmatpush2.bf16.msra.mxu0 %v1736
        %1815 = vmatprep.subr.bf16.mxu0 0
        %1816 = vmatpush2.bf16.msra.mxu0 %v1735
        %1817 = vmatprep.subr.bf16.mxu0 0
        %1818 = vmatpush2.bf16.msra.mxu0 %v1734
        %1819 = vmatprep.subr.bf16.mxu0 0
        %1820 = vmatpush2.bf16.msra.mxu0 %v1733
        %1821 = vmatprep.mubr.bf16.mxu0 %v1495
        %1822 = vmatmul.mubr.bf16.gmra.mxu0 %v1494
        %v1823 = vpop.f32.mrf.mxu0
        %v1824 = vadd.f32 %v1595, %v1823
        %v1825 = vpop.f32.mrf.mxu0
        %v1826 = vpop.f32.mrf.mxu0
        %v1827 = vadd.f32 %v1595, %v1826
        %v1828 = vpop.f32.mrf.mxu0
        %1829 = vmatprep.mubr.bf16.mxu0 %v1499
        %1830 = vmatmul.mubr.bf16.gmra.mxu0 %v1498
        %v1831 = vpop.f32.mrf.mxu0
        %v1832 = vadd.f32 %v1595, %v1831
        %v1833 = vpop.f32.mrf.mxu0
        %v1834 = vpop.f32.mrf.mxu0
        %v1835 = vadd.f32 %v1595, %v1834
        %v1836 = vpop.f32.mrf.mxu0
        %1837 = vmatprep.mubr.bf16.mxu0 %v1503
        %1838 = vmatmul.mubr.bf16.gmra.mxu0 %v1502
        %v1839 = vpop.f32.mrf.mxu0
        %v1840 = vadd.f32 %v1595, %v1839
        %v1841 = vpop.f32.mrf.mxu0
        %v1842 = vpop.f32.mrf.mxu0
        %v1843 = vadd.f32 %v1595, %v1842
        %v1844 = vpop.f32.mrf.mxu0
        %1845 = vmatprep.mubr.bf16.mxu0 %v1507
        %1846 = vmatmul.mubr.bf16.gmra.mxu0 %v1506
        %v1847 = vpop.f32.mrf.mxu0
        %v1848 = vadd.f32 %v1595, %v1847
        %v1849 = vpop.f32.mrf.mxu0
        %v1850 = vpop.f32.mrf.mxu0
        %v1851 = vadd.f32 %v1595, %v1850
        %v1852 = vpop.f32.mrf.mxu0
        %1853 = vmatprep.mubr.bf16.mxu0 %v1511
        %1854 = vmatmul.mubr.bf16.gmra.mxu0 %v1510
        %v1855 = vpop.f32.mrf.mxu0
        %v1856 = vadd.f32 %v1595, %v1855
        %v1857 = vpop.f32.mrf.mxu0
        %v1858 = vpop.f32.mrf.mxu0
        %v1859 = vadd.f32 %v1595, %v1858
        %v1860 = vpop.f32.mrf.mxu0
        %1861 = vmatprep.mubr.bf16.mxu0 %v1515
        %1862 = vmatmul.mubr.bf16.gmra.mxu0 %v1514
        %v1863 = vpop.f32.mrf.mxu0
        %v1864 = vadd.f32 %v1595, %v1863
        %v1865 = vpop.f32.mrf.mxu0
        %v1866 = vpop.f32.mrf.mxu0
        %v1867 = vadd.f32 %v1595, %v1866
        %v1868 = vpop.f32.mrf.mxu0
        %1869 = vmatprep.mubr.bf16.mxu0 %v1519
        %1870 = vmatmul.mubr.bf16.gmra.mxu0 %v1518
        %v1871 = vpop.f32.mrf.mxu0
        %v1872 = vadd.f32 %v1595, %v1871
        %v1873 = vpop.f32.mrf.mxu0
        %v1874 = vpop.f32.mrf.mxu0
        %v1875 = vadd.f32 %v1595, %v1874
        %v1876 = vpop.f32.mrf.mxu0
        %1877 = vmatprep.mubr.bf16.mxu0 %v1523
        %1878 = vmatmul.mubr.bf16.gmra.mxu0 %v1522
        %v1879 = vpop.f32.mrf.mxu0
        %v1880 = vadd.f32 %v1595, %v1879
        %v1881 = vpop.f32.mrf.mxu0
        %v1882 = vpop.f32.mrf.mxu0
        %v1883 = vadd.f32 %v1595, %v1882
        %v1884 = vpop.f32.mrf.mxu0
        %1885 = vdwg.mxu0
        %1886 = vmatprep.subr.bf16.mxu0 0
        %1887 = vmatpush1.bf16.msra.mxu0 %v1748
        %1888 = vmatprep.subr.bf16.mxu0 0
        %1889 = vmatpush1.bf16.msra.mxu0 %v1747
        %1890 = vmatprep.subr.bf16.mxu0 0
        %1891 = vmatpush1.bf16.msra.mxu0 %v1746
        %1892 = vmatprep.subr.bf16.mxu0 0
        %1893 = vmatpush1.bf16.msra.mxu0 %v1745
        %1894 = vmatprep.subr.bf16.mxu0 0
        %1895 = vmatpush1.bf16.msra.mxu0 %v1744
        %1896 = vmatprep.subr.bf16.mxu0 0
        %1897 = vmatpush1.bf16.msra.mxu0 %v1743
        %1898 = vmatprep.subr.bf16.mxu0 0
        %1899 = vmatpush1.bf16.msra.mxu0 %v1742
        %1900 = vmatprep.subr.bf16.mxu0 0
        %1901 = vmatpush1.bf16.msra.mxu0 %v1741
        %1902 = vmatprep.subr.bf16.mxu0 0
        %1903 = vmatpush2.bf16.msra.mxu0 %v1756
        %1904 = vmatprep.subr.bf16.mxu0 0
        %1905 = vmatpush2.bf16.msra.mxu0 %v1755
        %1906 = vmatprep.subr.bf16.mxu0 0
        %1907 = vmatpush2.bf16.msra.mxu0 %v1754
        %1908 = vmatprep.subr.bf16.mxu0 0
        %1909 = vmatpush2.bf16.msra.mxu0 %v1753
        %1910 = vmatprep.subr.bf16.mxu0 0
        %1911 = vmatpush2.bf16.msra.mxu0 %v1752
        %1912 = vmatprep.subr.bf16.mxu0 0
        %1913 = vmatpush2.bf16.msra.mxu0 %v1751
        %1914 = vmatprep.subr.bf16.mxu0 0
        %1915 = vmatpush2.bf16.msra.mxu0 %v1750
        %1916 = vmatprep.subr.bf16.mxu0 0
        %1917 = vmatpush2.bf16.msra.mxu0 %v1749
        %1918 = vmatprep.mubr.bf16.mxu0 %v1497
        %1919 = vmatmul.mubr.bf16.gmra.mxu0 %v1496
        %v1920 = vpop.f32.mrf.mxu0
        %v1921 = vadd.f32 %v1824, %v1920
        %v1922 = vpop.f32.mrf.mxu0
        %v1923 = vpop.f32.mrf.mxu0
        %v1924 = vadd.f32 %v1827, %v1923
        %v1925 = vpop.f32.mrf.mxu0
        %1926 = vmatprep.mubr.bf16.mxu0 %v1501
        %1927 = vmatmul.mubr.bf16.gmra.mxu0 %v1500
        %v1928 = vpop.f32.mrf.mxu0
        %v1929 = vadd.f32 %v1832, %v1928
        %v1930 = vpop.f32.mrf.mxu0
        %v1931 = vpop.f32.mrf.mxu0
        %v1932 = vadd.f32 %v1835, %v1931
        %v1933 = vpop.f32.mrf.mxu0
        %1934 = vmatprep.mubr.bf16.mxu0 %v1505
        %1935 = vmatmul.mubr.bf16.gmra.mxu0 %v1504
        %v1936 = vpop.f32.mrf.mxu0
        %v1937 = vadd.f32 %v1840, %v1936
        %v1938 = vpop.f32.mrf.mxu0
        %v1939 = vpop.f32.mrf.mxu0
        %v1940 = vadd.f32 %v1843, %v1939
        %v1941 = vpop.f32.mrf.mxu0
        %1942 = vmatprep.mubr.bf16.mxu0 %v1509
        %1943 = vmatmul.mubr.bf16.gmra.mxu0 %v1508
        %v1944 = vpop.f32.mrf.mxu0
        %v1945 = vadd.f32 %v1848, %v1944
        %v1946 = vpop.f32.mrf.mxu0
        %v1947 = vpop.f32.mrf.mxu0
        %v1948 = vadd.f32 %v1851, %v1947
        %v1949 = vpop.f32.mrf.mxu0
        %1950 = vmatprep.mubr.bf16.mxu0 %v1513
        %1951 = vmatmul.mubr.bf16.gmra.mxu0 %v1512
        %v1952 = vpop.f32.mrf.mxu0
        %v1953 = vadd.f32 %v1856, %v1952
        %v1954 = vpop.f32.mrf.mxu0
        %v1955 = vpop.f32.mrf.mxu0
        %v1956 = vadd.f32 %v1859, %v1955
        %v1957 = vpop.f32.mrf.mxu0
        %1958 = vmatprep.mubr.bf16.mxu0 %v1517
        %1959 = vmatmul.mubr.bf16.gmra.mxu0 %v1516
        %v1960 = vpop.f32.mrf.mxu0
        %v1961 = vadd.f32 %v1864, %v1960
        %v1962 = vpop.f32.mrf.mxu0
        %v1963 = vpop.f32.mrf.mxu0
        %v1964 = vadd.f32 %v1867, %v1963
        %v1965 = vpop.f32.mrf.mxu0
        %1966 = vmatprep.mubr.bf16.mxu0 %v1521
        %1967 = vmatmul.mubr.bf16.gmra.mxu0 %v1520
        %v1968 = vpop.f32.mrf.mxu0
        %v1969 = vadd.f32 %v1872, %v1968
        %v1970 = vpop.f32.mrf.mxu0
        %v1971 = vpop.f32.mrf.mxu0
        %v1972 = vadd.f32 %v1875, %v1971
        %v1973 = vpop.f32.mrf.mxu0
        %1974 = vmatprep.mubr.bf16.mxu0 %v1525
        %1975 = vmatmul.mubr.bf16.gmra.mxu0 %v1524
        %v1976 = vpop.f32.mrf.mxu0
        %v1977 = vadd.f32 %v1880, %v1976
        %v1978 = vpop.f32.mrf.mxu0
        %v1979 = vpop.f32.mrf.mxu0
        %v1980 = vadd.f32 %v1883, %v1979
        %v1981 = vpop.f32.mrf.mxu0
        %1982 = vdwg.mxu0
        %v1983 = vadd.f32 %v1921, %v390
        %v1984 = vadd.f32 %v1924, %v391
        %v1985 = vadd.f32 %v1929, %v392
        %v1986 = vadd.f32 %v1932, %v393
        %v1987 = vadd.f32 %v1937, %v394
        %v1988 = vadd.f32 %v1940, %v395
        %v1989 = vadd.f32 %v1945, %v396
        %v1990 = vadd.f32 %v1948, %v397
        %v1991 = vadd.f32 %v1953, %v398
        %v1992 = vadd.f32 %v1956, %v399
        %v1993 = vadd.f32 %v1961, %v400
        %v1994 = vadd.f32 %v1964, %v401
        %v1995 = vadd.f32 %v1969, %v402
        %v1996 = vadd.f32 %v1972, %v403
        %v1997 = vadd.f32 %v1977, %v404
        %v1998 = vadd.f32 %v1980, %v405
        %1999 = vst [vmem:[%s302] sm:$0xff] %v1983
        %2000 = vst [vmem:[%s302 + $0x8] sm:$0xff] %v1984
        %2001 = vst [vmem:[%s302 + $0x10] sm:$0xff] %v1985
        %2002 = vst [vmem:[%s302 + $0x18] sm:$0xff] %v1986
        %2003 = vst [vmem:[%s302 + $0x20] sm:$0xff] %v1987
        %2004 = vst [vmem:[%s302 + $0x28] sm:$0xff] %v1988
        %2005 = vst [vmem:[%s302 + $0x30] sm:$0xff] %v1989
        %2006 = vst [vmem:[%s302 + $0x38] sm:$0xff] %v1990
        %2007 = vst [vmem:[%s302 + $0x40] sm:$0xff] %v1991
        %2008 = vst [vmem:[%s302 + $0x48] sm:$0xff] %v1992
        %2009 = vst [vmem:[%s302 + $0x50] sm:$0xff] %v1993
        %2010 = vst [vmem:[%s302 + $0x58] sm:$0xff] %v1994
        %2011 = vst [vmem:[%s302 + $0x60] sm:$0xff] %v1995
        %2012 = vst [vmem:[%s302 + $0x68] sm:$0xff] %v1996
        %2013 = vst [vmem:[%s302 + $0x70] sm:$0xff] %v1997
        %2014 = vst [vmem:[%s302 + $0x78] sm:$0xff] %v1998
        %s2015 = sand.u32 %s158, 1
        %s2016 = scalar_lea.sflag [#allocation6], %s2015
        %s2017 = sand.u32 %s158, 1
        %s2018 = smul.addr %s2017, 128
        %s2019 = scalar_lea.vmem [#allocation12], %s2018
        // Predicated region
        $region61: #{tpu_custom_call.1} parent=39 // pred_check
          %p2020 = pneg %p168
        $region62: #{tpu_custom_call.1} parent=39 // pred_check_branch
          %2022 = sbr.rel (%p2020) target = $region64
        $region63: #{tpu_custom_call.1} parent=39 // pred_region
          %s2023 = smul.u32 16, %s28
          %s2025 = ssub.s32 2048, 2048
          %2026 = vsyncadd %s2016, %s2025
          %s2027 = smul.addr %s29, 16
          %s2028 = sadd.s32 %s2023, %s2027
          %s2029 = smul.addr %s2028, 128
          %s2030 = scalar_lea.hbm %s5, %s2029
          %s2031 = sshll.u32 %s2019, 4
          %s2032 = int_to_ptr.vmem [resolvable:$true] %s2031
          %2037 = dma.vmem_to_hbm [thread:$0]  %s2032, 2048, %s2030, %s2016, 128, 128, 8
        $region64: #{tpu_custom_call.1} parent=39 // pred_fallthru
          _
      $region40: #{tpu_custom_call.1} parent=5 // pred_fallthru
        _
      %p2038 = scmp.le.s32.totalorder 2, %s19
      // Predicated region
      $region65: #{tpu_custom_call.1} parent=5 // pred_check
        %p2039 = pneg %p2038
      $region66: #{tpu_custom_call.1} parent=5 // pred_check_branch
        %2041 = sbr.rel (%p2039) target = $region68
      $region67: #{tpu_custom_call.1} parent=5 // pred_region
        %s2042 = ssub.s32 %s19, 2
        // Predicated region
        $region69: #{tpu_custom_call.1} parent=67 // pred_check
          %p2043 = pneg %p174
        $region70: #{tpu_custom_call.1} parent=67 // pred_check_branch
          %2045 = sbr.rel (%p2043) target = $region72
        $region71: #{tpu_custom_call.1} parent=67 // pred_region
          %s2046 = sand.u32 %s159, 1
          %s2047 = scalar_lea.sflag [#allocation6], %s2046
          %s2048 = sand.u32 %s159, 1
          %s2049 = smul.addr %s2048, 128
          %s2050 = scalar_lea.vmem [#allocation12], %s2049
          %2051 = dma.done %s2047, 2048
        $region72: #{tpu_custom_call.1} parent=67 // pred_fallthru
          _
      $region68: #{tpu_custom_call.1} parent=5 // pred_fallthru
        _
    $region6: #{tpu_custom_call.1} parent=1 // loop_footer
      %s23 = sadd.s32 1, %s19
    $region7: #{tpu_custom_call.1} parent=1 // loop_footer_branch
      %18 = sbr.rel target = $region3
    $region8: #{tpu_custom_call.1} parent=1 // loop_exit
      _
    %2052 = vsyncpa [#allocation5], 1
    %s2053 = scalar_lea.sflag [#allocation5], 1
    %2054 = vsyncpa %s2053, 1
    %2055 = vsyncpa [#allocation8], 1
    %2056 = vsyncpa [#allocation11], 1
    %2057 = vsyncpa [#allocation6], 1
    %s2058 = scalar_lea.sflag [#allocation6], 1
    %2059 = vsyncpa %s2058, 1

</llo_original>
